<compile_context>
chip_gen: v7x
topology: tpu7x:2x2x1
jax: 0.10.0
libtpu: 0.0.40
codegen_flags: <defaults>
</compile_context>

<pallas_src>
import functools
import math

import jax
import jax.numpy as jnp
import numpy as np
from jax.experimental import pallas as pl
from jax.experimental.pallas import tpu as pltpu

_VMEM_LIMIT = 64 * 1024 * 1024


def _round_up(x, m):
    return ((x + m - 1) // m) * m


def _largest_tile(n, cap):
    """Largest multiple of 8 that divides n and is <= cap (n is a multiple of 8)."""
    start = (min(cap, n) // 8) * 8
    for t in range(start, 7, -8):
        if n % t == 0:
            return t
    return 8


def _choose_seq_tiles(seq_len):
    """Pick padded length + q/kv tiles.  Prefer tiles that divide S (no mask)."""
    sp = seq_len if seq_len % 8 == 0 else _round_up(seq_len, 8)
    if _largest_tile(sp, 256) < min(64, sp):
        sp = _round_up(seq_len, 128)  # pad + mask rather than tiny tiles
    tq = _largest_tile(sp, 256)
    tk = _largest_tile(sp, 512)
    return sp, tq, tk


# ---------------------------------------------------------------------------
# Pallas kernels
# ---------------------------------------------------------------------------
def _qkv_head_split_kernel(x_ref, w_ref, b_ref, o_ref):
    """(TM, C) @ (C, 3C) + bias, then scatter hd-wide column groups so the
    output lands directly in the (3*nh, M, hd) head-split layout."""
    acc = jnp.dot(x_ref[...].astype(jnp.bfloat16), w_ref[...],
                  preferred_element_type=jnp.float32)           # (TM, 3C) f32
    y = (acc + b_ref[...]).astype(o_ref.dtype)                  # (TM, 3C) bf16
    nj, _, hd = o_ref.shape
    for j in range(nj):                                         # static unroll
        o_ref[j] = y[:, j * hd:(j + 1) * hd]


def _flash_attn_kernel(q_ref, k_ref, v_ref, o_ref, m_sc, l_sc, acc_sc, *,
                       seq_len, tk, masked):
    """All heads of one batch element per step; online softmax over kv tiles.

    q_ref: (nh, TQ, hd) bf16 (scale already folded into the qkv weights)
    k_ref/v_ref: (nh, TK, hd) bf16;  o_ref: (TQ, nh*hd) bf16.
    """
    ki = pl.program_id(2)

    @pl.when(ki == 0)
    def _init():
        m_sc[...] = jnp.full_like(m_sc, -1e30)
        l_sc[...] = jnp.zeros_like(l_sc)
        acc_sc[...] = jnp.zeros_like(acc_sc)

    # Contraction over the last dim: no k transpose / relayout per step.
    s = jnp.einsum('hqd,hkd->hqk', q_ref[...], k_ref[...],
                   preferred_element_type=jnp.float32)          # (nh, TQ, TK) f32

    if masked:  # static branch, only compiled when the sequence was padded
        kpos = ki * tk + jax.lax.broadcasted_iota(jnp.int32, s.shape, 2)
        s = jnp.where(kpos < seq_len, s, -1e30)

    m_prev = m_sc[...]
    m_new = jnp.maximum(m_prev, jnp.max(s, axis=-1, keepdims=True))
    alpha = jnp.exp(m_prev - m_new)
    p = jnp.exp(s - m_new)
    l_sc[...] = alpha * l_sc[...] + jnp.sum(p, axis=-1, keepdims=True)
    acc_sc[...] = alpha * acc_sc[...] + jnp.einsum(
        'hqk,hkd->hqd', p.astype(jnp.bfloat16), v_ref[...],
        preferred_element_type=jnp.float32)
    m_sc[...] = m_new

    @pl.when(ki == pl.num_programs(2) - 1)
    def _finalize():
        nh, _, hd = acc_sc.shape
        for h in range(nh):                                     # static unroll
            inv_l = pl.reciprocal(l_sc[h], approx=True)         # (TQ, 1)
            o_ref[:, h * hd:(h + 1) * hd] = (acc_sc[h] * inv_l).astype(o_ref.dtype)


def _proj_kernel(x_ref, w_ref, b_ref, o_ref):
    """(TM, C) bf16 @ (C, C) bf16 + f32 bias -> (TM, C) f32 (lane-dense)."""
    acc = jnp.dot(x_ref[...], w_ref[...], preferred_element_type=jnp.float32)
    o_ref[...] = (acc + b_ref[...]).astype(o_ref.dtype)


# ---------------------------------------------------------------------------
# Kernel wrappers
# ---------------------------------------------------------------------------
def qkv_projection(x, w_bf16, b_f32, num_heads, head_dim):
    """x: (M, C) f32; w: (C, 3C) bf16; b: (1, 3C) f32.
    Returns qkv in head-split layout (3*nh, M, hd) bf16, leading index = sel*nh+h."""
    M, C = x.shape
    C3 = w_bf16.shape[1]
    TM = _largest_tile(M, 256)
    return pl.pallas_call(
        _qkv_head_split_kernel,
        out_shape=jax.ShapeDtypeStruct((3 * num_heads, M, head_dim), jnp.bfloat16),
        grid=(M // TM,),
        in_specs=[
            pl.BlockSpec((TM, C), lambda i: (i, 0)),
            pl.BlockSpec((C, C3), lambda i: (0, 0)),   # weight resident in VMEM
            pl.BlockSpec((1, C3), lambda i: (0, 0)),
        ],
        out_specs=pl.BlockSpec((3 * num_heads, TM, head_dim), lambda i: (0, i, 0)),
        compiler_params=pltpu.CompilerParams(
            dimension_semantics=("parallel",),
            vmem_limit_bytes=_VMEM_LIMIT),
    )(x, w_bf16, b_f32)


def flash_attention(qkv, batch, seq_pad, seq_len, num_heads, head_dim, tq, tk):
    """qkv: (3*nh, B*SP, hd) bf16 -> attention output in (B*SP, C) layout, bf16."""
    C = num_heads * head_dim
    nq, nk = seq_pad // tq, seq_pad // tk
    kernel = functools.partial(_flash_attn_kernel, seq_len=seq_len, tk=tk,
                               masked=(seq_pad != seq_len))
    return pl.pallas_call(
        kernel,
        out_shape=jax.ShapeDtypeStruct((batch * seq_pad, C), jnp.bfloat16),
        grid=(batch, nq, nk),
        in_specs=[
            pl.BlockSpec((num_heads, tq, head_dim),
                         lambda b, qi, ki: (0, b * nq + qi, 0)),      # q
            pl.BlockSpec((num_heads, tk, head_dim),
                         lambda b, qi, ki: (1, b * nk + ki, 0)),      # k
            pl.BlockSpec((num_heads, tk, head_dim),
                         lambda b, qi, ki: (2, b * nk + ki, 0)),      # v
        ],
        out_specs=pl.BlockSpec((tq, C), lambda b, qi, ki: (b * nq + qi, 0)),
        scratch_shapes=[
            pltpu.VMEM((num_heads, tq, 1), jnp.float32),   # running max m
            pltpu.VMEM((num_heads, tq, 1), jnp.float32),   # running denom l
            pltpu.VMEM((num_heads, tq, head_dim), jnp.float32),  # running numerator
        ],
        compiler_params=pltpu.CompilerParams(
            dimension_semantics=("parallel", "parallel", "arbitrary"),
            vmem_limit_bytes=_VMEM_LIMIT),
    )(qkv, qkv, qkv)


def proj_linear(x_bf16, w_bf16, b_f32):
    """x: (M, C) bf16; w: (C, C) bf16; b: (1, C) f32 -> (M, C) f32."""
    M, C = x_bf16.shape
    TM = _largest_tile(M, 512)
    return pl.pallas_call(
        _proj_kernel,
        out_shape=jax.ShapeDtypeStruct((M, C), jnp.float32),
        grid=(M // TM,),
        in_specs=[
            pl.BlockSpec((TM, C), lambda i: (i, 0)),
            pl.BlockSpec((C, C), lambda i: (0, 0)),    # weight resident in VMEM
            pl.BlockSpec((1, C), lambda i: (0, 0)),
        ],
        out_specs=pl.BlockSpec((TM, C), lambda i: (i, 0)),
        compiler_params=pltpu.CompilerParams(
            dimension_semantics=("parallel",),
            vmem_limit_bytes=_VMEM_LIMIT),
    )(x_bf16, w_bf16, b_f32)


# ---------------------------------------------------------------------------
# Attention module (forward semantics of the PyTorch Attention, use_rel_pos=False)
# ---------------------------------------------------------------------------
class AttentionPallas:
    def __init__(self, key, dim, num_heads=8, qkv_bias=True, use_rel_pos=False):
        assert dim % num_heads == 0
        if use_rel_pos:
            # TODO(synk): decomposed relative-position embeddings (add_decomposed_rel_pos)
            # are not implemented; default use_rel_pos=False path only.
            raise NotImplementedError("use_rel_pos=True not supported")
        self.num_heads = num_heads
        self.head_dim = dim // num_heads
        self.scale = self.head_dim ** (-0.5)
        self.dim = dim

        bound = 1.0 / math.sqrt(dim)
        k1, k2, k3, k4 = jax.random.split(key, 4)
        # f32 master weights (y = x @ W + b, same map as torch Linear).
        self.w_qkv = jax.random.uniform(k1, (dim, 3 * dim), jnp.float32, -bound, bound)
        self.b_qkv = (jax.random.uniform(k2, (3 * dim,), jnp.float32, -bound, bound)
                      if qkv_bias else jnp.zeros((3 * dim,), jnp.float32))
        self.w_proj = jax.random.uniform(k3, (dim, dim), jnp.float32, -bound, bound)
        self.b_proj = jax.random.uniform(k4, (dim,), jnp.float32, -bound, bound)

        # Kernel-side parameters, prepared once:
        #  - softmax scale folded into the q columns (zero runtime cost),
        #  - weights pre-cast to bf16 (half the HBM bytes, no per-tile casts),
        #  - biases kept f32 (added to the f32 accumulator).
        w_qkv_s = self.w_qkv.at[:, :dim].multiply(self.scale)
        b_qkv_s = self.b_qkv.at[:dim].multiply(self.scale)
        self.w_qkv_bf16 = w_qkv_s.astype(jnp.bfloat16)
        self.b_qkv_f32 = b_qkv_s.reshape(1, 3 * dim)
        self.w_proj_bf16 = self.w_proj.astype(jnp.bfloat16)
        self.b_proj_f32 = self.b_proj.reshape(1, dim)

    def __call__(self, x):
        """x: (B, D, H, W, C) f32 -> (B, D, H, W, C) f32."""
        B, D, H, W, C = x.shape
        assert C == self.dim
        S = D * H * W
        nh, hd = self.num_heads, self.head_dim
        SP, tq, tk = _choose_seq_tiles(S)

        xr = x.reshape(B, S, C)
        if SP != S:
            xr = jnp.pad(xr, ((0, 0), (0, SP - S), (0, 0)))
        x2 = xr.reshape(B * SP, C)

        # 1) fused qkv projection; output already head-split: (3*nh, B*SP, hd) bf16.
        qkv = qkv_projection(x2, self.w_qkv_bf16, self.b_qkv_f32, nh, hd)

        # 2) flash attention (all heads per grid step); output written directly
        #    into the (B*SP, C) layout the projection consumes — no transposes.
        o = flash_attention(qkv, B, SP, S, nh, hd, tq, tk)

        # 3) output projection (lane-dense, full-C contraction on the MXU).
        out = proj_linear(o, self.w_proj_bf16, self.b_proj_f32)

        out = out.reshape(B, SP, C)[:, :S, :].reshape(B, D, H, W, C)
        return out


# ---------------------------------------------------------------------------
# Pure-JAX reference (tolerance check against the Pallas path)
# ---------------------------------------------------------------------------
def attention_reference(x, w_qkv, b_qkv, w_proj, b_proj, num_heads):
    B, D, H, W, C = x.shape
    S = D * H * W
    hd = C // num_heads
    scale = hd ** (-0.5)
    qkv = x.reshape(B * S, C) @ w_qkv + b_qkv
    qkv = qkv.reshape(B, S, 3, num_heads, hd).transpose(2, 0, 3, 1, 4)
    qkv = qkv.reshape(3, B * num_heads, S, hd)
    q, k, v = qkv[0], qkv[1], qkv[2]
    attn = (q * scale) @ jnp.swapaxes(k, -2, -1)
    attn = jax.nn.softmax(attn, axis=-1)
    o = attn @ v
    o = o.reshape(B, num_heads, S, hd).transpose(0, 2, 1, 3).reshape(B * S, C)
    out = o @ w_proj + b_proj
    return out.reshape(B, D, H, W, C)


if __name__ == "__main__":
    key = jax.random.PRNGKey(0)
    kx, kp = jax.random.split(key)

    # Small shapes consistent with the module: tokens over a 4x4x4 volume.
    B, D, H, W, dim, num_heads = 2, 4, 4, 4, 128, 4
    x = jax.random.normal(kx, (B, D, H, W, dim), dtype=jnp.float32)

    model = AttentionPallas(kp, dim=dim, num_heads=num_heads, qkv_bias=True)
    out = model(x)
    out = jax.block_until_ready(out)

    assert out.shape == (B, D, H, W, dim), out.shape
    assert bool(jnp.all(jnp.isfinite(out)))

    ref = attention_reference(x, model.w_qkv, model.b_qkv, model.w_proj,
                              model.b_proj, num_heads)
    np.testing.assert_allclose(np.asarray(out), np.asarray(ref),
                               atol=3e-2, rtol=3e-2)
    print("KERNEL_OK")
</pallas_src>

<mosaic_0001>
module attributes {stable_mosaic.version = 11 : i64} {
  func.func @_qkv_head_split_kernel(%arg0: i32, %arg1: memref<128x128xf32, #tpu.memory_space<vmem>>, %arg2: memref<128x384xbf16, #tpu.memory_space<vmem>>, %arg3: memref<1x384xf32, #tpu.memory_space<vmem>>, %arg4: memref<12x128x32xbf16, #tpu.memory_space<vmem>>) attributes {dimension_semantics = [#tpu.dimension_semantics<parallel>], iteration_bounds = array<i64: 1>, scalar_prefetch = 0 : i64, scratch_operands = 0 : i64, tpu.core_type = #tpu.core_type<tc>, window_params = [{transform_indices = @transform_0, window_bounds = array<i64: 128, 128>}, {pipeline_mode = #tpu.pipeline_mode<synchronous>, transform_indices = @transform_1, window_bounds = array<i64: 128, 384>}, {pipeline_mode = #tpu.pipeline_mode<synchronous>, transform_indices = @transform_2, window_bounds = array<i64: 1, 384>}, {transform_indices = @transform_3, window_bounds = array<i64: 12, 128, 32>}]} {
    %c0 = arith.constant 0 : index
    %c0_0 = arith.constant 0 : index
    %0 = vector.load %arg1[%c0, %c0_0] : memref<128x128xf32, #tpu.memory_space<vmem>>, vector<128x128xf32>
    %1 = arith.truncf %0 : vector<128x128xf32> to vector<128x128xbf16>
    %c0_1 = arith.constant 0 : index
    %c0_2 = arith.constant 0 : index
    %2 = vector.load %arg2[%c0_1, %c0_2] : memref<128x384xbf16, #tpu.memory_space<vmem>>, vector<128x384xbf16>
    %cst = arith.constant dense<0.000000e+00> : vector<128x384xf32>
    %3 = tpu.matmul %1, %2, %cst {dimension_numbers = #tpu.dot_dimension_numbers<[1], [0], [0], [1], [0, 0, 1, 1], [], []>} : vector<128x128xbf16>, vector<128x384xbf16>, vector<128x384xf32> -> vector<128x384xf32>
    %c0_3 = arith.constant 0 : index
    %c0_4 = arith.constant 0 : index
    %4 = vector.load %arg3[%c0_3, %c0_4] : memref<1x384xf32, #tpu.memory_space<vmem>>, vector<1x384xf32>
    %5 = vector.broadcast %4 : vector<1x384xf32> to vector<128x384xf32>
    %6 = arith.addf %3, %5 : vector<128x384xf32>
    %7 = arith.truncf %6 : vector<128x384xf32> to vector<128x384xbf16>
    %8 = vector.extract_strided_slice %7 {offsets = [0, 0], sizes = [128, 32], strides = [1, 1]} : vector<128x384xbf16> to vector<128x32xbf16>
    %c0_5 = arith.constant 0 : index
    %c0_6 = arith.constant 0 : index
    %c0_7 = arith.constant 0 : index
    %9 = vector.load %arg4[%c0_5, %c0_6, %c0_7] : memref<12x128x32xbf16, #tpu.memory_space<vmem>>, vector<1x128x32xbf16>
    %10 = vector.shape_cast %9 : vector<1x128x32xbf16> to vector<128x32xbf16>
    %11 = vector.shape_cast %8 : vector<128x32xbf16> to vector<1x128x32xbf16>
    tpu.vector_store %arg4[%c0_5, %c0_6, %c0_7], %11 {strides = array<i32>} : memref<12x128x32xbf16, #tpu.memory_space<vmem>>, vector<1x128x32xbf16>,
    %12 = vector.extract_strided_slice %7 {offsets = [0, 32], sizes = [128, 32], strides = [1, 1]} : vector<128x384xbf16> to vector<128x32xbf16>
    %c1 = arith.constant 1 : index
    %c0_8 = arith.constant 0 : index
    %c0_9 = arith.constant 0 : index
    %13 = vector.load %arg4[%c1, %c0_8, %c0_9] : memref<12x128x32xbf16, #tpu.memory_space<vmem>>, vector<1x128x32xbf16>
    %14 = vector.shape_cast %13 : vector<1x128x32xbf16> to vector<128x32xbf16>
    %15 = vector.shape_cast %12 : vector<128x32xbf16> to vector<1x128x32xbf16>
    tpu.vector_store %arg4[%c1, %c0_8, %c0_9], %15 {strides = array<i32>} : memref<12x128x32xbf16, #tpu.memory_space<vmem>>, vector<1x128x32xbf16>,
    %16 = vector.extract_strided_slice %7 {offsets = [0, 64], sizes = [128, 32], strides = [1, 1]} : vector<128x384xbf16> to vector<128x32xbf16>
    %c2 = arith.constant 2 : index
    %c0_10 = arith.constant 0 : index
    %c0_11 = arith.constant 0 : index
    %17 = vector.load %arg4[%c2, %c0_10, %c0_11] : memref<12x128x32xbf16, #tpu.memory_space<vmem>>, vector<1x128x32xbf16>
    %18 = vector.shape_cast %17 : vector<1x128x32xbf16> to vector<128x32xbf16>
    %19 = vector.shape_cast %16 : vector<128x32xbf16> to vector<1x128x32xbf16>
    tpu.vector_store %arg4[%c2, %c0_10, %c0_11], %19 {strides = array<i32>} : memref<12x128x32xbf16, #tpu.memory_space<vmem>>, vector<1x128x32xbf16>,
    %20 = vector.extract_strided_slice %7 {offsets = [0, 96], sizes = [128, 32], strides = [1, 1]} : vector<128x384xbf16> to vector<128x32xbf16>
    %c3 = arith.constant 3 : index
    %c0_12 = arith.constant 0 : index
    %c0_13 = arith.constant 0 : index
    %21 = vector.load %arg4[%c3, %c0_12, %c0_13] : memref<12x128x32xbf16, #tpu.memory_space<vmem>>, vector<1x128x32xbf16>
    %22 = vector.shape_cast %21 : vector<1x128x32xbf16> to vector<128x32xbf16>
    %23 = vector.shape_cast %20 : vector<128x32xbf16> to vector<1x128x32xbf16>
    tpu.vector_store %arg4[%c3, %c0_12, %c0_13], %23 {strides = array<i32>} : memref<12x128x32xbf16, #tpu.memory_space<vmem>>, vector<1x128x32xbf16>,
    %24 = vector.extract_strided_slice %7 {offsets = [0, 128], sizes = [128, 32], strides = [1, 1]} : vector<128x384xbf16> to vector<128x32xbf16>
    %c4 = arith.constant 4 : index
    %c0_14 = arith.constant 0 : index
    %c0_15 = arith.constant 0 : index
    %25 = vector.load %arg4[%c4, %c0_14, %c0_15] : memref<12x128x32xbf16, #tpu.memory_space<vmem>>, vector<1x128x32xbf16>
    %26 = vector.shape_cast %25 : vector<1x128x32xbf16> to vector<128x32xbf16>
    %27 = vector.shape_cast %24 : vector<128x32xbf16> to vector<1x128x32xbf16>
    tpu.vector_store %arg4[%c4, %c0_14, %c0_15], %27 {strides = array<i32>} : memref<12x128x32xbf16, #tpu.memory_space<vmem>>, vector<1x128x32xbf16>,
    %28 = vector.extract_strided_slice %7 {offsets = [0, 160], sizes = [128, 32], strides = [1, 1]} : vector<128x384xbf16> to vector<128x32xbf16>
    %c5 = arith.constant 5 : index
    %c0_16 = arith.constant 0 : index
    %c0_17 = arith.constant 0 : index
    %29 = vector.load %arg4[%c5, %c0_16, %c0_17] : memref<12x128x32xbf16, #tpu.memory_space<vmem>>, vector<1x128x32xbf16>
    %30 = vector.shape_cast %29 : vector<1x128x32xbf16> to vector<128x32xbf16>
    %31 = vector.shape_cast %28 : vector<128x32xbf16> to vector<1x128x32xbf16>
    tpu.vector_store %arg4[%c5, %c0_16, %c0_17], %31 {strides = array<i32>} : memref<12x128x32xbf16, #tpu.memory_space<vmem>>, vector<1x128x32xbf16>,
    %32 = vector.extract_strided_slice %7 {offsets = [0, 192], sizes = [128, 32], strides = [1, 1]} : vector<128x384xbf16> to vector<128x32xbf16>
    %c6 = arith.constant 6 : index
    %c0_18 = arith.constant 0 : index
    %c0_19 = arith.constant 0 : index
    %33 = vector.load %arg4[%c6, %c0_18, %c0_19] : memref<12x128x32xbf16, #tpu.memory_space<vmem>>, vector<1x128x32xbf16>
    %34 = vector.shape_cast %33 : vector<1x128x32xbf16> to vector<128x32xbf16>
    %35 = vector.shape_cast %32 : vector<128x32xbf16> to vector<1x128x32xbf16>
    tpu.vector_store %arg4[%c6, %c0_18, %c0_19], %35 {strides = array<i32>} : memref<12x128x32xbf16, #tpu.memory_space<vmem>>, vector<1x128x32xbf16>,
    %36 = vector.extract_strided_slice %7 {offsets = [0, 224], sizes = [128, 32], strides = [1, 1]} : vector<128x384xbf16> to vector<128x32xbf16>
    %c7 = arith.constant 7 : index
    %c0_20 = arith.constant 0 : index
    %c0_21 = arith.constant 0 : index
    %37 = vector.load %arg4[%c7, %c0_20, %c0_21] : memref<12x128x32xbf16, #tpu.memory_space<vmem>>, vector<1x128x32xbf16>
    %38 = vector.shape_cast %37 : vector<1x128x32xbf16> to vector<128x32xbf16>
    %39 = vector.shape_cast %36 : vector<128x32xbf16> to vector<1x128x32xbf16>
    tpu.vector_store %arg4[%c7, %c0_20, %c0_21], %39 {strides = array<i32>} : memref<12x128x32xbf16, #tpu.memory_space<vmem>>, vector<1x128x32xbf16>,
    %40 = vector.extract_strided_slice %7 {offsets = [0, 256], sizes = [128, 32], strides = [1, 1]} : vector<128x384xbf16> to vector<128x32xbf16>
    %c8 = arith.constant 8 : index
    %c0_22 = arith.constant 0 : index
    %c0_23 = arith.constant 0 : index
    %41 = vector.load %arg4[%c8, %c0_22, %c0_23] : memref<12x128x32xbf16, #tpu.memory_space<vmem>>, vector<1x128x32xbf16>
    %42 = vector.shape_cast %41 : vector<1x128x32xbf16> to vector<128x32xbf16>
    %43 = vector.shape_cast %40 : vector<128x32xbf16> to vector<1x128x32xbf16>
    tpu.vector_store %arg4[%c8, %c0_22, %c0_23], %43 {strides = array<i32>} : memref<12x128x32xbf16, #tpu.memory_space<vmem>>, vector<1x128x32xbf16>,
    %44 = vector.extract_strided_slice %7 {offsets = [0, 288], sizes = [128, 32], strides = [1, 1]} : vector<128x384xbf16> to vector<128x32xbf16>
    %c9 = arith.constant 9 : index
    %c0_24 = arith.constant 0 : index
    %c0_25 = arith.constant 0 : index
    %45 = vector.load %arg4[%c9, %c0_24, %c0_25] : memref<12x128x32xbf16, #tpu.memory_space<vmem>>, vector<1x128x32xbf16>
    %46 = vector.shape_cast %45 : vector<1x128x32xbf16> to vector<128x32xbf16>
    %47 = vector.shape_cast %44 : vector<128x32xbf16> to vector<1x128x32xbf16>
    tpu.vector_store %arg4[%c9, %c0_24, %c0_25], %47 {strides = array<i32>} : memref<12x128x32xbf16, #tpu.memory_space<vmem>>, vector<1x128x32xbf16>,
    %48 = vector.extract_strided_slice %7 {offsets = [0, 320], sizes = [128, 32], strides = [1, 1]} : vector<128x384xbf16> to vector<128x32xbf16>
    %c10 = arith.constant 10 : index
    %c0_26 = arith.constant 0 : index
    %c0_27 = arith.constant 0 : index
    %49 = vector.load %arg4[%c10, %c0_26, %c0_27] : memref<12x128x32xbf16, #tpu.memory_space<vmem>>, vector<1x128x32xbf16>
    %50 = vector.shape_cast %49 : vector<1x128x32xbf16> to vector<128x32xbf16>
    %51 = vector.shape_cast %48 : vector<128x32xbf16> to vector<1x128x32xbf16>
    tpu.vector_store %arg4[%c10, %c0_26, %c0_27], %51 {strides = array<i32>} : memref<12x128x32xbf16, #tpu.memory_space<vmem>>, vector<1x128x32xbf16>,
    %52 = vector.extract_strided_slice %7 {offsets = [0, 352], sizes = [128, 32], strides = [1, 1]} : vector<128x384xbf16> to vector<128x32xbf16>
    %c11 = arith.constant 11 : index
    %c0_28 = arith.constant 0 : index
    %c0_29 = arith.constant 0 : index
    %53 = vector.load %arg4[%c11, %c0_28, %c0_29] : memref<12x128x32xbf16, #tpu.memory_space<vmem>>, vector<1x128x32xbf16>
    %54 = vector.shape_cast %53 : vector<1x128x32xbf16> to vector<128x32xbf16>
    %55 = vector.shape_cast %52 : vector<128x32xbf16> to vector<1x128x32xbf16>
    tpu.vector_store %arg4[%c11, %c0_28, %c0_29], %55 {strides = array<i32>} : memref<12x128x32xbf16, #tpu.memory_space<vmem>>, vector<1x128x32xbf16>,
    return
  }
  func.func @transform_0(%arg0: i32) -> (i32, i32) {
    %c0_i32 = arith.constant 0 : i32
    %c0_i32_0 = arith.constant 0 : i32
    return %arg0, %c0_i32 : i32, i32
  }
  func.func @transform_1(%arg0: i32) -> (i32, i32) {
    %c0_i32 = arith.constant 0 : i32
    %c0_i32_0 = arith.constant 0 : i32
    %c0_i32_1 = arith.constant 0 : i32
    return %c0_i32, %c0_i32_0 : i32, i32
  }
  func.func @transform_2(%arg0: i32) -> (i32, i32) {
    %c0_i32 = arith.constant 0 : i32
    %c0_i32_0 = arith.constant 0 : i32
    %c0_i32_1 = arith.constant 0 : i32
    return %c0_i32, %c0_i32_0 : i32, i32
  }
  func.func @transform_3(%arg0: i32) -> (i32, i32, i32) {
    %c0_i32 = arith.constant 0 : i32
    %c0_i32_0 = arith.constant 0 : i32
    %c0_i32_1 = arith.constant 0 : i32
    return %c0_i32, %arg0, %c0_i32_0 : i32, i32, i32
  }
}

</mosaic_0001>

<llo_original>
// kernel: tpu_custom_call.1
$region0: #{tpu_custom_call.1}
  #allocation0 [shape = 'u32[]', space=smem, size = 0x4, offset = 0x4, fixed_abs, tag = 'smem constant byte address 0x4 - core index']
  #allocation1 [shape = 'u32[144,128]{1,0:T(1,128)}', space=vmem, size = 0x12000, scoped, tag = 'internal scratch']
  %s0 = inlined_call_operand.hbm [shape: f32[128,128], index: 0, kind: input, shape index: {}]
  %s1 = inlined_call_operand.hbm [shape: bf16[128,384], index: 1, kind: input, shape index: {}]
  %s2 = inlined_call_operand.hbm [shape: f32[1,384], index: 2, kind: input, shape index: {}]
  %s3 = inlined_call_operand.hbm [shape: bf16[12,128,32], index: 3, kind: output, shape index: {}]
  %s4 = sld [smem:[#allocation0]]
  $region34: #{tpu_custom_call.1} parent=0
    _
  %s6 = ssub.s32 1, %s4
  %s7 = scalar_select 0, %s6, %s4
  $region1: #{tpu_custom_call.1} parent=0
    #allocation2 [shape = 'u8[65536]{0}', space=vmem, size = 0x10000, scoped, tag = 'input window, operand 0, single buffered']
    #allocation3 [shape = 's32[1]{0}', space=sflag, size = 0x4, scoped, tag = 'scoped memory for tpu_custom_call.1']
    #allocation4 [shape = 's32[1]{0}', space=sflag, size = 0x4, scoped, tag = 'scoped memory for tpu_custom_call.1']
    #allocation5 [shape = 'u8[98304]{0}', space=vmem, size = 0x18000, scoped, tag = 'input window, operand 1, single buffered']
    #allocation6 [shape = 's32[1]{0}', space=sflag, size = 0x4, scoped, tag = 'scoped memory for tpu_custom_call.1']
    #allocation7 [shape = 'u8[1536]{0}', space=vmem, size = 0x800, scoped, tag = 'input window, operand 2, single buffered']
    #allocation8 [shape = 'u8[393216]{0}', space=vmem, size = 0x60000, scoped, tag = 'output window, operand 0, single buffered']
    %8 = vsyncpa [#allocation3], 0
    %9 = vsyncpa [#allocation6], 0
    %10 = vsyncpa [#allocation4], 0
    // Predicated region
    $region2: #{tpu_custom_call.1} parent=1 // pred_check
      _
    $region3: #{tpu_custom_call.1} parent=1 // pred_check_branch
      %12 = sbr.rel (0) target = $region5
    $region4: #{tpu_custom_call.1} parent=1 // pred_region
      %s14 = ssub.s32 2048, 2048
      %15 = vsyncadd [#allocation3], %s14
      %s16 = sshll.u32 [#allocation2], 4
      %s17 = int_to_ptr.vmem [resolvable:$true] %s16
      %22 = dma.hbm_to_vmem [thread:$0]  %s0, 2048, %s17, [#allocation3], 128, 128, 8
    $region5: #{tpu_custom_call.1} parent=1 // pred_fallthru
      _
    // Predicated region
    $region6: #{tpu_custom_call.1} parent=1 // pred_check
      _
    $region7: #{tpu_custom_call.1} parent=1 // pred_check_branch
      %24 = sbr.rel (0) target = $region9
    $region8: #{tpu_custom_call.1} parent=1 // pred_region
      %s26 = ssub.s32 3072, 3072
      %27 = vsyncadd [#allocation6], %s26
      %s28 = sshll.u32 [#allocation5], 4
      %s29 = int_to_ptr.vmem [resolvable:$true] %s28
      %34 = dma.hbm_to_vmem [thread:$0]  %s1, 3072, %s29, [#allocation6], 192, 192, 12
    $region9: #{tpu_custom_call.1} parent=1 // pred_fallthru
      _
    // Predicated region
    $region10: #{tpu_custom_call.1} parent=1 // pred_check
      _
    $region11: #{tpu_custom_call.1} parent=1 // pred_check_branch
      %36 = sbr.rel (0) target = $region13
    $region12: #{tpu_custom_call.1} parent=1 // pred_region
      %s38 = ssub.s32 48, 48
      %39 = vsyncadd [#allocation6], %s38
      %s41 = sshll.u32 [#allocation7], 4
      %s42 = int_to_ptr.vmem [resolvable:$true] %s41
      %44 = dma.hbm_to_vmem [thread:$0]  %s2, 48, %s42, [#allocation6]
    $region13: #{tpu_custom_call.1} parent=1 // pred_fallthru
      _
    // Predicated region
    $region14: #{tpu_custom_call.1} parent=1 // pred_check
      _
    $region15: #{tpu_custom_call.1} parent=1 // pred_check_branch
      %46 = sbr.rel (0) target = $region17
    $region16: #{tpu_custom_call.1} parent=1 // pred_region
      %47 = dma.done [#allocation3], 2048
    $region17: #{tpu_custom_call.1} parent=1 // pred_fallthru
      _
    // Predicated region
    $region18: #{tpu_custom_call.1} parent=1 // pred_check
      _
    $region19: #{tpu_custom_call.1} parent=1 // pred_check_branch
      %49 = sbr.rel (0) target = $region21
    $region20: #{tpu_custom_call.1} parent=1 // pred_region
      %50 = dma.done [#allocation6], 3072
    $region21: #{tpu_custom_call.1} parent=1 // pred_fallthru
      _
    // Predicated region
    $region22: #{tpu_custom_call.1} parent=1 // pred_check
      _
    $region23: #{tpu_custom_call.1} parent=1 // pred_check_branch
      %52 = sbr.rel (0) target = $region25
    $region24: #{tpu_custom_call.1} parent=1 // pred_region
      %53 = dma.done [#allocation6], 48
    $region25: #{tpu_custom_call.1} parent=1 // pred_fallthru
      _
    %v55 = vld [vmem:[#allocation2] sm:$0xff]
    %v56 = vld [vmem:[#allocation2 + $0x8] sm:$0xff]
    %v57 = vld [vmem:[#allocation2 + $0x10] sm:$0xff]
    %v58 = vld [vmem:[#allocation2 + $0x18] sm:$0xff]
    %v59 = vld [vmem:[#allocation2 + $0x20] sm:$0xff]
    %v60 = vld [vmem:[#allocation2 + $0x28] sm:$0xff]
    %v61 = vld [vmem:[#allocation2 + $0x30] sm:$0xff]
    %v62 = vld [vmem:[#allocation2 + $0x38] sm:$0xff]
    %v63 = vld [vmem:[#allocation2 + $0x40] sm:$0xff]
    %v64 = vld [vmem:[#allocation2 + $0x48] sm:$0xff]
    %v65 = vld [vmem:[#allocation2 + $0x50] sm:$0xff]
    %v66 = vld [vmem:[#allocation2 + $0x58] sm:$0xff]
    %v67 = vld [vmem:[#allocation2 + $0x60] sm:$0xff]
    %v68 = vld [vmem:[#allocation2 + $0x68] sm:$0xff]
    %v69 = vld [vmem:[#allocation2 + $0x70] sm:$0xff]
    %v70 = vld [vmem:[#allocation2 + $0x78] sm:$0xff]
    %v71 = vpack.c.bf16 %v56, %v55
    %v72 = vpack.c.bf16 %v58, %v57
    %v73 = vpack.c.bf16 %v60, %v59
    %v74 = vpack.c.bf16 %v62, %v61
    %v75 = vpack.c.bf16 %v64, %v63
    %v76 = vpack.c.bf16 %v66, %v65
    %v77 = vpack.c.bf16 %v68, %v67
    %v78 = vpack.c.bf16 %v70, %v69
    %v79 = vld [vmem:[#allocation5] sm:$0xff]
    %v80 = vld [vmem:[#allocation5 + $0x8] sm:$0xf]
    %v81 = vld [vmem:[#allocation5 + $0xc] sm:$0xff]
    %v82 = vld [vmem:[#allocation5 + $0x14] sm:$0xf]
    %v83 = vld [vmem:[#allocation5 + $0x18] sm:$0xff]
    %v84 = vld [vmem:[#allocation5 + $0x20] sm:$0xf]
    %v85 = vld [vmem:[#allocation5 + $0x24] sm:$0xff]
    %v86 = vld [vmem:[#allocation5 + $0x2c] sm:$0xf]
    %v87 = vld [vmem:[#allocation5 + $0x30] sm:$0xff]
    %v88 = vld [vmem:[#allocation5 + $0x38] sm:$0xf]
    %v89 = vld [vmem:[#allocation5 + $0x3c] sm:$0xff]
    %v90 = vld [vmem:[#allocation5 + $0x44] sm:$0xf]
    %v91 = vld [vmem:[#allocation5 + $0x48] sm:$0xff]
    %v92 = vld [vmem:[#allocation5 + $0x50] sm:$0xf]
    %v93 = vld [vmem:[#allocation5 + $0x54] sm:$0xff]
    %v94 = vld [vmem:[#allocation5 + $0x5c] sm:$0xf]
    %v95 = vld [vmem:[#allocation5 + $0x60] sm:$0xff]
    %v96 = vld [vmem:[#allocation5 + $0x68] sm:$0xf]
    %v97 = vld [vmem:[#allocation5 + $0x6c] sm:$0xff]
    %v98 = vld [vmem:[#allocation5 + $0x74] sm:$0xf]
    %v99 = vld [vmem:[#allocation5 + $0x78] sm:$0xff]
    %v100 = vld [vmem:[#allocation5 + $0x80] sm:$0xf]
    %v101 = vld [vmem:[#allocation5 + $0x84] sm:$0xff]
    %v102 = vld [vmem:[#allocation5 + $0x8c] sm:$0xf]
    %v103 = vld [vmem:[#allocation5 + $0x90] sm:$0xff]
    %v104 = vld [vmem:[#allocation5 + $0x98] sm:$0xf]
    %v105 = vld [vmem:[#allocation5 + $0x9c] sm:$0xff]
    %v106 = vld [vmem:[#allocation5 + $0xa4] sm:$0xf]
    %v107 = vld [vmem:[#allocation5 + $0xa8] sm:$0xff]
    %v108 = vld [vmem:[#allocation5 + $0xb0] sm:$0xf]
    %v109 = vld [vmem:[#allocation5 + $0xb4] sm:$0xff]
    %v110 = vld [vmem:[#allocation5 + $0xbc] sm:$0xf]
    %v111 = vld [vmem:[#allocation7] sm:$0x7]
    %v113 = vlaneseq
    %v114 = vshrl.u32 %v113, 7
    %v115 = vsub.s32 0, %v114
    %v116 = vrot.slane %v111, %v115
    %v117 = vlaneseq
    %v118 = vshrl.u32 %v117, 7
    %v119 = vsub.s32 1, %v118
    %v120 = vrot.slane %v111, %v119
    %v121 = vlaneseq
    %v122 = vshrl.u32 %v121, 7
    %v123 = vsub.s32 2, %v122
    %v124 = vrot.slane %v111, %v123
    %v160 = vunpack.c.l.b16 %v79
    %v161 = vunpack.c.h.b16 %v79
    %v162 = vunpack.c.l.b16 %v80
    %v163 = vunpack.c.l.b16 %v81
    %v164 = vunpack.c.h.b16 %v81
    %v165 = vunpack.c.l.b16 %v82
    %v166 = vunpack.c.l.b16 %v83
    %v167 = vunpack.c.h.b16 %v83
    %v168 = vunpack.c.l.b16 %v84
    %v169 = vunpack.c.l.b16 %v85
    %v170 = vunpack.c.h.b16 %v85
    %v171 = vunpack.c.l.b16 %v86
    %v172 = vunpack.c.l.b16 %v87
    %v173 = vunpack.c.h.b16 %v87
    %v174 = vunpack.c.l.b16 %v88
    %v175 = vunpack.c.l.b16 %v89
    %v176 = vunpack.c.h.b16 %v89
    %v177 = vunpack.c.l.b16 %v90
    %v178 = vunpack.c.l.b16 %v91
    %v179 = vunpack.c.h.b16 %v91
    %v180 = vunpack.c.l.b16 %v92
    %v181 = vunpack.c.l.b16 %v93
    %v182 = vunpack.c.h.b16 %v93
    %v183 = vunpack.c.l.b16 %v94
    %v184 = vunpack.c.l.b16 %v95
    %v185 = vunpack.c.h.b16 %v95
    %v186 = vunpack.c.l.b16 %v96
    %v187 = vunpack.c.l.b16 %v97
    %v188 = vunpack.c.h.b16 %v97
    %v189 = vunpack.c.l.b16 %v98
    %v190 = vunpack.c.l.b16 %v99
    %v191 = vunpack.c.h.b16 %v99
    %v192 = vunpack.c.l.b16 %v100
    %v193 = vunpack.c.l.b16 %v101
    %v194 = vunpack.c.h.b16 %v101
    %v195 = vunpack.c.l.b16 %v102
    %v196 = vunpack.c.l.b16 %v103
    %v197 = vunpack.c.h.b16 %v103
    %v198 = vunpack.c.l.b16 %v104
    %v199 = vunpack.c.l.b16 %v105
    %v200 = vunpack.c.h.b16 %v105
    %v201 = vunpack.c.l.b16 %v106
    %v202 = vunpack.c.l.b16 %v107
    %v203 = vunpack.c.h.b16 %v107
    %v204 = vunpack.c.l.b16 %v108
    %v205 = vunpack.c.l.b16 %v109
    %v206 = vunpack.c.h.b16 %v109
    %v207 = vunpack.c.l.b16 %v110
    %v208 = vpack.c.b16 %v163, %v160
    %v209 = vpack.c.b16 %v164, %v161
    %v210 = vpack.c.b16 %v165, %v162
    %v211 = vpack.c.b16 %v169, %v166
    %v212 = vpack.c.b16 %v170, %v167
    %v213 = vpack.c.b16 %v171, %v168
    %v214 = vpack.c.b16 %v175, %v172
    %v215 = vpack.c.b16 %v176, %v173
    %v216 = vpack.c.b16 %v177, %v174
    %v217 = vpack.c.b16 %v181, %v178
    %v218 = vpack.c.b16 %v182, %v179
    %v219 = vpack.c.b16 %v183, %v180
    %v220 = vpack.c.b16 %v187, %v184
    %v221 = vpack.c.b16 %v188, %v185
    %v222 = vpack.c.b16 %v189, %v186
    %v223 = vpack.c.b16 %v193, %v190
    %v224 = vpack.c.b16 %v194, %v191
    %v225 = vpack.c.b16 %v195, %v192
    %v226 = vpack.c.b16 %v199, %v196
    %v227 = vpack.c.b16 %v200, %v197
    %v228 = vpack.c.b16 %v201, %v198
    %v229 = vpack.c.b16 %v205, %v202
    %v230 = vpack.c.b16 %v206, %v203
    %v231 = vpack.c.b16 %v207, %v204
    %256 = vmatprep.subr.bf16.mxu0 %v209
    %257 = vmatpush1.bf16.msra.mxu0 %v208
    %258 = vmatprep.subr.bf16.mxu0 %v212
    %259 = vmatpush1.bf16.msra.mxu0 %v211
    %260 = vmatprep.subr.bf16.mxu0 %v215
    %261 = vmatpush1.bf16.msra.mxu0 %v214
    %262 = vmatprep.subr.bf16.mxu0 %v218
    %263 = vmatpush1.bf16.msra.mxu0 %v217
    %264 = vmatprep.subr.bf16.mxu0 %v221
    %265 = vmatpush1.bf16.msra.mxu0 %v220
    %266 = vmatprep.subr.bf16.mxu0 %v224
    %267 = vmatpush1.bf16.msra.mxu0 %v223
    %268 = vmatprep.subr.bf16.mxu0 %v227
    %269 = vmatpush1.bf16.msra.mxu0 %v226
    %270 = vmatprep.subr.bf16.mxu0 %v230
    %271 = vmatpush1.bf16.msra.mxu0 %v229
    %272 = vmatprep.subr.bf16.mxu0 0
    %273 = vmatpush1.bf16.msra.mxu0 0
    %274 = vmatprep.subr.bf16.mxu0 0
    %275 = vmatpush1.bf16.msra.mxu0 0
    %276 = vmatprep.subr.bf16.mxu0 0
    %277 = vmatpush1.bf16.msra.mxu0 0
    %278 = vmatprep.subr.bf16.mxu0 0
    %279 = vmatpush1.bf16.msra.mxu0 0
    %280 = vmatprep.subr.bf16.mxu0 0
    %281 = vmatpush1.bf16.msra.mxu0 0
    %282 = vmatprep.subr.bf16.mxu0 0
    %283 = vmatpush1.bf16.msra.mxu0 0
    %284 = vmatprep.subr.bf16.mxu0 0
    %285 = vmatpush1.bf16.msra.mxu0 0
    %286 = vmatprep.subr.bf16.mxu0 0
    %287 = vmatpush1.bf16.msra.mxu0 0
    %288 = vmatprep.mubr.bf16.mxu0 0
    %289 = vmatmul.mubr.bf16.gmra.mrb[0].mxu0 %v71
    %v290 = vpop.f32.mrb[0].mxu0
    %v291 = vadd.f32 %v116, %v290
    %v292 = vpop.f32.mrb[0].mxu0
    %v293 = vadd.f32 %v120, %v292
    %v294 = vpop.f32.mrb[0].mxu0
    %v295 = vadd.f32 %v116, %v294
    %v296 = vpop.f32.mrb[0].mxu0
    %v297 = vadd.f32 %v120, %v296
    %298 = vmatprep.mubr.bf16.mxu0 0
    %299 = vmatmul.mubr.bf16.gmra.mrb[0].mxu0 %v72
    %v300 = vpop.f32.mrb[0].mxu0
    %v301 = vadd.f32 %v116, %v300
    %v302 = vpop.f32.mrb[0].mxu0
    %v303 = vadd.f32 %v120, %v302
    %v304 = vpop.f32.mrb[0].mxu0
    %v305 = vadd.f32 %v116, %v304
    %v306 = vpop.f32.mrb[0].mxu0
    %v307 = vadd.f32 %v120, %v306
    %308 = vmatprep.mubr.bf16.mxu0 0
    %309 = vmatmul.mubr.bf16.gmra.mrb[0].mxu0 %v73
    %v310 = vpop.f32.mrb[0].mxu0
    %v311 = vadd.f32 %v116, %v310
    %v312 = vpop.f32.mrb[0].mxu0
    %v313 = vadd.f32 %v120, %v312
    %v314 = vpop.f32.mrb[0].mxu0
    %v315 = vadd.f32 %v116, %v314
    %v316 = vpop.f32.mrb[0].mxu0
    %v317 = vadd.f32 %v120, %v316
    %318 = vmatprep.mubr.bf16.mxu0 0
    %319 = vmatmul.mubr.bf16.gmra.mrb[0].mxu0 %v74
    %v320 = vpop.f32.mrb[0].mxu0
    %v321 = vadd.f32 %v116, %v320
    %v322 = vpop.f32.mrb[0].mxu0
    %v323 = vadd.f32 %v120, %v322
    %v324 = vpop.f32.mrb[0].mxu0
    %v325 = vadd.f32 %v116, %v324
    %v326 = vpop.f32.mrb[0].mxu0
    %v327 = vadd.f32 %v120, %v326
    %328 = vmatprep.mubr.bf16.mxu0 0
    %329 = vmatmul.mubr.bf16.gmra.mrb[0].mxu0 %v75
    %v330 = vpop.f32.mrb[0].mxu0
    %v331 = vadd.f32 %v116, %v330
    %v332 = vpop.f32.mrb[0].mxu0
    %v333 = vadd.f32 %v120, %v332
    %v334 = vpop.f32.mrb[0].mxu0
    %v335 = vadd.f32 %v116, %v334
    %v336 = vpop.f32.mrb[0].mxu0
    %v337 = vadd.f32 %v120, %v336
    %338 = vmatprep.mubr.bf16.mxu0 0
    %339 = vmatmul.mubr.bf16.gmra.mrb[0].mxu0 %v76
    %v340 = vpop.f32.mrb[0].mxu0
    %v341 = vadd.f32 %v116, %v340
    %v342 = vpop.f32.mrb[0].mxu0
    %v343 = vadd.f32 %v120, %v342
    %v344 = vpop.f32.mrb[0].mxu0
    %v345 = vadd.f32 %v116, %v344
    %v346 = vpop.f32.mrb[0].mxu0
    %v347 = vadd.f32 %v120, %v346
    %348 = vmatprep.mubr.bf16.mxu0 0
    %349 = vmatmul.mubr.bf16.gmra.mrb[0].mxu0 %v77
    %v350 = vpop.f32.mrb[0].mxu0
    %v351 = vadd.f32 %v116, %v350
    %v352 = vpop.f32.mrb[0].mxu0
    %v353 = vadd.f32 %v120, %v352
    %v354 = vpop.f32.mrb[0].mxu0
    %v355 = vadd.f32 %v116, %v354
    %v356 = vpop.f32.mrb[0].mxu0
    %v357 = vadd.f32 %v120, %v356
    %358 = vmatprep.mubr.bf16.mxu0 0
    %359 = vmatmul.mubr.bf16.gmra.mrb[0].mxu0 %v78
    %v360 = vpop.f32.mrb[0].mxu0
    %v361 = vadd.f32 %v116, %v360
    %v362 = vpop.f32.mrb[0].mxu0
    %v363 = vadd.f32 %v120, %v362
    %v364 = vpop.f32.mrb[0].mxu0
    %v365 = vadd.f32 %v116, %v364
    %v366 = vpop.f32.mrb[0].mxu0
    %v367 = vadd.f32 %v120, %v366
    %368 = vdwg.mxu0
    %369 = vmatprep.subr.bf16.mxu0 0
    %370 = vmatpush1.bf16.msra.mxu0 %v210
    %371 = vmatprep.subr.bf16.mxu0 0
    %372 = vmatpush1.bf16.msra.mxu0 %v213
    %373 = vmatprep.subr.bf16.mxu0 0
    %374 = vmatpush1.bf16.msra.mxu0 %v216
    %375 = vmatprep.subr.bf16.mxu0 0
    %376 = vmatpush1.bf16.msra.mxu0 %v219
    %377 = vmatprep.subr.bf16.mxu0 0
    %378 = vmatpush1.bf16.msra.mxu0 %v222
    %379 = vmatprep.subr.bf16.mxu0 0
    %380 = vmatpush1.bf16.msra.mxu0 %v225
    %381 = vmatprep.subr.bf16.mxu0 0
    %382 = vmatpush1.bf16.msra.mxu0 %v228
    %383 = vmatprep.subr.bf16.mxu0 0
    %384 = vmatpush1.bf16.msra.mxu0 %v231
    %385 = vmatprep.subr.bf16.mxu0 0
    %386 = vmatpush1.bf16.msra.mxu0 0
    %387 = vmatprep.subr.bf16.mxu0 0
    %388 = vmatpush1.bf16.msra.mxu0 0
    %389 = vmatprep.subr.bf16.mxu0 0
    %390 = vmatpush1.bf16.msra.mxu0 0
    %391 = vmatprep.subr.bf16.mxu0 0
    %392 = vmatpush1.bf16.msra.mxu0 0
    %393 = vmatprep.subr.bf16.mxu0 0
    %394 = vmatpush1.bf16.msra.mxu0 0
    %395 = vmatprep.subr.bf16.mxu0 0
    %396 = vmatpush1.bf16.msra.mxu0 0
    %397 = vmatprep.subr.bf16.mxu0 0
    %398 = vmatpush1.bf16.msra.mxu0 0
    %399 = vmatprep.subr.bf16.mxu0 0
    %400 = vmatpush1.bf16.msra.mxu0 0
    %401 = vmatprep.mubr.bf16.mxu0 0
    %402 = vmatmul.mubr.bf16.gmra.mrb[0].mxu0 %v71
    %v403 = vpop.f32.mrb[0].mxu0
    %v404 = vadd.f32 %v124, %v403
    %v405 = vpop.f32.mrb[0].mxu0
    %v406 = vpop.f32.mrb[0].mxu0
    %v407 = vadd.f32 %v124, %v406
    %v408 = vpop.f32.mrb[0].mxu0
    %409 = vmatprep.mubr.bf16.mxu0 0
    %410 = vmatmul.mubr.bf16.gmra.mrb[0].mxu0 %v72
    %v411 = vpop.f32.mrb[0].mxu0
    %v412 = vadd.f32 %v124, %v411
    %v413 = vpop.f32.mrb[0].mxu0
    %v414 = vpop.f32.mrb[0].mxu0
    %v415 = vadd.f32 %v124, %v414
    %v416 = vpop.f32.mrb[0].mxu0
    %417 = vmatprep.mubr.bf16.mxu0 0
    %418 = vmatmul.mubr.bf16.gmra.mrb[0].mxu0 %v73
    %v419 = vpop.f32.mrb[0].mxu0
    %v420 = vadd.f32 %v124, %v419
    %v421 = vpop.f32.mrb[0].mxu0
    %v422 = vpop.f32.mrb[0].mxu0
    %v423 = vadd.f32 %v124, %v422
    %v424 = vpop.f32.mrb[0].mxu0
    %425 = vmatprep.mubr.bf16.mxu0 0
    %426 = vmatmul.mubr.bf16.gmra.mrb[0].mxu0 %v74
    %v427 = vpop.f32.mrb[0].mxu0
    %v428 = vadd.f32 %v124, %v427
    %v429 = vpop.f32.mrb[0].mxu0
    %v430 = vpop.f32.mrb[0].mxu0
    %v431 = vadd.f32 %v124, %v430
    %v432 = vpop.f32.mrb[0].mxu0
    %433 = vmatprep.mubr.bf16.mxu0 0
    %434 = vmatmul.mubr.bf16.gmra.mrb[0].mxu0 %v75
    %v435 = vpop.f32.mrb[0].mxu0
    %v436 = vadd.f32 %v124, %v435
    %v437 = vpop.f32.mrb[0].mxu0
    %v438 = vpop.f32.mrb[0].mxu0
    %v439 = vadd.f32 %v124, %v438
    %v440 = vpop.f32.mrb[0].mxu0
    %441 = vmatprep.mubr.bf16.mxu0 0
    %442 = vmatmul.mubr.bf16.gmra.mrb[0].mxu0 %v76
    %v443 = vpop.f32.mrb[0].mxu0
    %v444 = vadd.f32 %v124, %v443
    %v445 = vpop.f32.mrb[0].mxu0
    %v446 = vpop.f32.mrb[0].mxu0
    %v447 = vadd.f32 %v124, %v446
    %v448 = vpop.f32.mrb[0].mxu0
    %449 = vmatprep.mubr.bf16.mxu0 0
    %450 = vmatmul.mubr.bf16.gmra.mrb[0].mxu0 %v77
    %v451 = vpop.f32.mrb[0].mxu0
    %v452 = vadd.f32 %v124, %v451
    %v453 = vpop.f32.mrb[0].mxu0
    %v454 = vpop.f32.mrb[0].mxu0
    %v455 = vadd.f32 %v124, %v454
    %v456 = vpop.f32.mrb[0].mxu0
    %457 = vmatprep.mubr.bf16.mxu0 0
    %458 = vmatmul.mubr.bf16.gmra.mrb[0].mxu0 %v78
    %v459 = vpop.f32.mrb[0].mxu0
    %v460 = vadd.f32 %v124, %v459
    %v461 = vpop.f32.mrb[0].mxu0
    %v462 = vpop.f32.mrb[0].mxu0
    %v463 = vadd.f32 %v124, %v462
    %v464 = vpop.f32.mrb[0].mxu0
    %465 = vdwg.mxu0
    %v466 = vpack.c.bf16 %v295, %v291
    %v467 = vpack.c.bf16 %v297, %v293
    %v468 = vpack.c.bf16 %v407, %v404
    %v469 = vpack.c.bf16 %v305, %v301
    %v470 = vpack.c.bf16 %v307, %v303
    %v471 = vpack.c.bf16 %v415, %v412
    %v472 = vpack.c.bf16 %v315, %v311
    %v473 = vpack.c.bf16 %v317, %v313
    %v474 = vpack.c.bf16 %v423, %v420
    %v475 = vpack.c.bf16 %v325, %v321
    %v476 = vpack.c.bf16 %v327, %v323
    %v477 = vpack.c.bf16 %v431, %v428
    %v478 = vpack.c.bf16 %v335, %v331
    %v479 = vpack.c.bf16 %v337, %v333
    %v480 = vpack.c.bf16 %v439, %v436
    %v481 = vpack.c.bf16 %v345, %v341
    %v482 = vpack.c.bf16 %v347, %v343
    %v483 = vpack.c.bf16 %v447, %v444
    %v484 = vpack.c.bf16 %v355, %v351
    %v485 = vpack.c.bf16 %v357, %v353
    %v486 = vpack.c.bf16 %v455, %v452
    %v487 = vpack.c.bf16 %v365, %v361
    %v488 = vpack.c.bf16 %v367, %v363
    %v489 = vpack.c.bf16 %v463, %v460
    %v498 = vunpack.c.l.b16 %v466
    %v499 = vunpack.c.h.b16 %v466
    %v500 = vunpack.c.l.b16 %v469
    %v501 = vunpack.c.h.b16 %v469
    %v502 = vunpack.c.l.b16 %v472
    %v503 = vunpack.c.h.b16 %v472
    %v504 = vunpack.c.l.b16 %v475
    %v505 = vunpack.c.h.b16 %v475
    %v506 = vunpack.c.l.b16 %v478
    %v507 = vunpack.c.h.b16 %v478
    %v508 = vunpack.c.l.b16 %v481
    %v509 = vunpack.c.h.b16 %v481
    %v510 = vunpack.c.l.b16 %v484
    %v511 = vunpack.c.h.b16 %v484
    %v512 = vunpack.c.l.b16 %v487
    %v513 = vunpack.c.h.b16 %v487
    %v514 = vpack.c.b16 %v498, %v498
    %v515 = vpack.c.b16 %v499, %v499
    %v516 = vpack.c.b16 %v500, %v500
    %v517 = vpack.c.b16 %v501, %v501
    %v518 = vpack.c.b16 %v502, %v502
    %v519 = vpack.c.b16 %v503, %v503
    %v520 = vpack.c.b16 %v504, %v504
    %v521 = vpack.c.b16 %v505, %v505
    %v522 = vpack.c.b16 %v506, %v506
    %v523 = vpack.c.b16 %v507, %v507
    %v524 = vpack.c.b16 %v508, %v508
    %v525 = vpack.c.b16 %v509, %v509
    %v526 = vpack.c.b16 %v510, %v510
    %v527 = vpack.c.b16 %v511, %v511
    %v528 = vpack.c.b16 %v512, %v512
    %v529 = vpack.c.b16 %v513, %v513
    %vm546 = vcmask 257024
    %547 = vst.msk [vmem:[#allocation8] sm:$0xf] %vm546, %v514
    %548 = vst.msk [vmem:[#allocation8 + $0x4] sm:$0xf] %vm546, %v515
    %549 = vst.msk [vmem:[#allocation8 + $0x8] sm:$0xf] %vm546, %v516
    %550 = vst.msk [vmem:[#allocation8 + $0xc] sm:$0xf] %vm546, %v517
    %551 = vst.msk [vmem:[#allocation8 + $0x10] sm:$0xf] %vm546, %v518
    %552 = vst.msk [vmem:[#allocation8 + $0x14] sm:$0xf] %vm546, %v519
    %553 = vst.msk [vmem:[#allocation8 + $0x18] sm:$0xf] %vm546, %v520
    %554 = vst.msk [vmem:[#allocation8 + $0x1c] sm:$0xf] %vm546, %v521
    %555 = vst.msk [vmem:[#allocation8 + $0x20] sm:$0xf] %vm546, %v522
    %556 = vst.msk [vmem:[#allocation8 + $0x24] sm:$0xf] %vm546, %v523
    %557 = vst.msk [vmem:[#allocation8 + $0x28] sm:$0xf] %vm546, %v524
    %558 = vst.msk [vmem:[#allocation8 + $0x2c] sm:$0xf] %vm546, %v525
    %559 = vst.msk [vmem:[#allocation8 + $0x30] sm:$0xf] %vm546, %v526
    %560 = vst.msk [vmem:[#allocation8 + $0x34] sm:$0xf] %vm546, %v527
    %561 = vst.msk [vmem:[#allocation8 + $0x38] sm:$0xf] %vm546, %v528
    %562 = vst.msk [vmem:[#allocation8 + $0x3c] sm:$0xf] %vm546, %v529
    %563 = vrot.lane.b32.xlu0 %v514, 96
    %v564 = vpop.permute.xlu0 %563
    %565 = vrot.lane.b32.xlu0 %v515, 96
    %v566 = vpop.permute.xlu0 %565
    %567 = vrot.lane.b32.xlu0 %v516, 96
    %v568 = vpop.permute.xlu0 %567
    %569 = vrot.lane.b32.xlu0 %v517, 96
    %v570 = vpop.permute.xlu0 %569
    %571 = vrot.lane.b32.xlu0 %v518, 96
    %v572 = vpop.permute.xlu0 %571
    %573 = vrot.lane.b32.xlu0 %v519, 96
    %v574 = vpop.permute.xlu0 %573
    %575 = vrot.lane.b32.xlu0 %v520, 96
    %v576 = vpop.permute.xlu0 %575
    %577 = vrot.lane.b32.xlu0 %v521, 96
    %v578 = vpop.permute.xlu0 %577
    %579 = vrot.lane.b32.xlu0 %v522, 96
    %v580 = vpop.permute.xlu0 %579
    %581 = vrot.lane.b32.xlu0 %v523, 96
    %v582 = vpop.permute.xlu0 %581
    %583 = vrot.lane.b32.xlu0 %v524, 96
    %v584 = vpop.permute.xlu0 %583
    %585 = vrot.lane.b32.xlu0 %v525, 96
    %v586 = vpop.permute.xlu0 %585
    %587 = vrot.lane.b32.xlu0 %v526, 96
    %v588 = vpop.permute.xlu0 %587
    %589 = vrot.lane.b32.xlu0 %v527, 96
    %v590 = vpop.permute.xlu0 %589
    %591 = vrot.lane.b32.xlu0 %v528, 96
    %v592 = vpop.permute.xlu0 %591
    %593 = vrot.lane.b32.xlu0 %v529, 96
    %v594 = vpop.permute.xlu0 %593
    %s611 = scalar_lea.vmem [#allocation8], 64
    %612 = vst.msk [vmem:[%s611] sm:$0xf] %vm546, %v564
    %613 = vst.msk [vmem:[%s611 + $0x4] sm:$0xf] %vm546, %v566
    %614 = vst.msk [vmem:[%s611 + $0x8] sm:$0xf] %vm546, %v568
    %615 = vst.msk [vmem:[%s611 + $0xc] sm:$0xf] %vm546, %v570
    %616 = vst.msk [vmem:[%s611 + $0x10] sm:$0xf] %vm546, %v572
    %617 = vst.msk [vmem:[%s611 + $0x14] sm:$0xf] %vm546, %v574
    %618 = vst.msk [vmem:[%s611 + $0x18] sm:$0xf] %vm546, %v576
    %619 = vst.msk [vmem:[%s611 + $0x1c] sm:$0xf] %vm546, %v578
    %620 = vst.msk [vmem:[%s611 + $0x20] sm:$0xf] %vm546, %v580
    %621 = vst.msk [vmem:[%s611 + $0x24] sm:$0xf] %vm546, %v582
    %622 = vst.msk [vmem:[%s611 + $0x28] sm:$0xf] %vm546, %v584
    %623 = vst.msk [vmem:[%s611 + $0x2c] sm:$0xf] %vm546, %v586
    %624 = vst.msk [vmem:[%s611 + $0x30] sm:$0xf] %vm546, %v588
    %625 = vst.msk [vmem:[%s611 + $0x34] sm:$0xf] %vm546, %v590
    %626 = vst.msk [vmem:[%s611 + $0x38] sm:$0xf] %vm546, %v592
    %627 = vst.msk [vmem:[%s611 + $0x3c] sm:$0xf] %vm546, %v594
    %628 = vrot.lane.b32.xlu0 %v514, 64
    %v629 = vpop.permute.xlu0 %628
    %630 = vrot.lane.b32.xlu0 %v515, 64
    %v631 = vpop.permute.xlu0 %630
    %632 = vrot.lane.b32.xlu0 %v516, 64
    %v633 = vpop.permute.xlu0 %632
    %634 = vrot.lane.b32.xlu0 %v517, 64
    %v635 = vpop.permute.xlu0 %634
    %636 = vrot.lane.b32.xlu0 %v518, 64
    %v637 = vpop.permute.xlu0 %636
    %638 = vrot.lane.b32.xlu0 %v519, 64
    %v639 = vpop.permute.xlu0 %638
    %640 = vrot.lane.b32.xlu0 %v520, 64
    %v641 = vpop.permute.xlu0 %640
    %642 = vrot.lane.b32.xlu0 %v521, 64
    %v643 = vpop.permute.xlu0 %642
    %644 = vrot.lane.b32.xlu0 %v522, 64
    %v645 = vpop.permute.xlu0 %644
    %646 = vrot.lane.b32.xlu0 %v523, 64
    %v647 = vpop.permute.xlu0 %646
    %648 = vrot.lane.b32.xlu0 %v524, 64
    %v649 = vpop.permute.xlu0 %648
    %650 = vrot.lane.b32.xlu0 %v525, 64
    %v651 = vpop.permute.xlu0 %650
    %652 = vrot.lane.b32.xlu0 %v526, 64
    %v653 = vpop.permute.xlu0 %652
    %654 = vrot.lane.b32.xlu0 %v527, 64
    %v655 = vpop.permute.xlu0 %654
    %656 = vrot.lane.b32.xlu0 %v528, 64
    %v657 = vpop.permute.xlu0 %656
    %658 = vrot.lane.b32.xlu0 %v529, 64
    %v659 = vpop.permute.xlu0 %658
    %s676 = scalar_lea.vmem [#allocation8], 128
    %677 = vst.msk [vmem:[%s676] sm:$0xf] %vm546, %v629
    %678 = vst.msk [vmem:[%s676 + $0x4] sm:$0xf] %vm546, %v631
    %679 = vst.msk [vmem:[%s676 + $0x8] sm:$0xf] %vm546, %v633
    %680 = vst.msk [vmem:[%s676 + $0xc] sm:$0xf] %vm546, %v635
    %681 = vst.msk [vmem:[%s676 + $0x10] sm:$0xf] %vm546, %v637
    %682 = vst.msk [vmem:[%s676 + $0x14] sm:$0xf] %vm546, %v639
    %683 = vst.msk [vmem:[%s676 + $0x18] sm:$0xf] %vm546, %v641
    %684 = vst.msk [vmem:[%s676 + $0x1c] sm:$0xf] %vm546, %v643
    %685 = vst.msk [vmem:[%s676 + $0x20] sm:$0xf] %vm546, %v645
    %686 = vst.msk [vmem:[%s676 + $0x24] sm:$0xf] %vm546, %v647
    %687 = vst.msk [vmem:[%s676 + $0x28] sm:$0xf] %vm546, %v649
    %688 = vst.msk [vmem:[%s676 + $0x2c] sm:$0xf] %vm546, %v651
    %689 = vst.msk [vmem:[%s676 + $0x30] sm:$0xf] %vm546, %v653
    %690 = vst.msk [vmem:[%s676 + $0x34] sm:$0xf] %vm546, %v655
    %691 = vst.msk [vmem:[%s676 + $0x38] sm:$0xf] %vm546, %v657
    %692 = vst.msk [vmem:[%s676 + $0x3c] sm:$0xf] %vm546, %v659
    %693 = vrot.lane.b32.xlu0 %v514, 32
    %v694 = vpop.permute.xlu0 %693
    %695 = vrot.lane.b32.xlu0 %v515, 32
    %v696 = vpop.permute.xlu0 %695
    %697 = vrot.lane.b32.xlu0 %v516, 32
    %v698 = vpop.permute.xlu0 %697
    %699 = vrot.lane.b32.xlu0 %v517, 32
    %v700 = vpop.permute.xlu0 %699
    %701 = vrot.lane.b32.xlu0 %v518, 32
    %v702 = vpop.permute.xlu0 %701
    %703 = vrot.lane.b32.xlu0 %v519, 32
    %v704 = vpop.permute.xlu0 %703
    %705 = vrot.lane.b32.xlu0 %v520, 32
    %v706 = vpop.permute.xlu0 %705
    %707 = vrot.lane.b32.xlu0 %v521, 32
    %v708 = vpop.permute.xlu0 %707
    %709 = vrot.lane.b32.xlu0 %v522, 32
    %v710 = vpop.permute.xlu0 %709
    %711 = vrot.lane.b32.xlu0 %v523, 32
    %v712 = vpop.permute.xlu0 %711
    %713 = vrot.lane.b32.xlu0 %v524, 32
    %v714 = vpop.permute.xlu0 %713
    %715 = vrot.lane.b32.xlu0 %v525, 32
    %v716 = vpop.permute.xlu0 %715
    %717 = vrot.lane.b32.xlu0 %v526, 32
    %v718 = vpop.permute.xlu0 %717
    %719 = vrot.lane.b32.xlu0 %v527, 32
    %v720 = vpop.permute.xlu0 %719
    %721 = vrot.lane.b32.xlu0 %v528, 32
    %v722 = vpop.permute.xlu0 %721
    %723 = vrot.lane.b32.xlu0 %v529, 32
    %v724 = vpop.permute.xlu0 %723
    %s741 = scalar_lea.vmem [#allocation8], 192
    %742 = vst.msk [vmem:[%s741] sm:$0xf] %vm546, %v694
    %743 = vst.msk [vmem:[%s741 + $0x4] sm:$0xf] %vm546, %v696
    %744 = vst.msk [vmem:[%s741 + $0x8] sm:$0xf] %vm546, %v698
    %745 = vst.msk [vmem:[%s741 + $0xc] sm:$0xf] %vm546, %v700
    %746 = vst.msk [vmem:[%s741 + $0x10] sm:$0xf] %vm546, %v702
    %747 = vst.msk [vmem:[%s741 + $0x14] sm:$0xf] %vm546, %v704
    %748 = vst.msk [vmem:[%s741 + $0x18] sm:$0xf] %vm546, %v706
    %749 = vst.msk [vmem:[%s741 + $0x1c] sm:$0xf] %vm546, %v708
    %750 = vst.msk [vmem:[%s741 + $0x20] sm:$0xf] %vm546, %v710
    %751 = vst.msk [vmem:[%s741 + $0x24] sm:$0xf] %vm546, %v712
    %752 = vst.msk [vmem:[%s741 + $0x28] sm:$0xf] %vm546, %v714
    %753 = vst.msk [vmem:[%s741 + $0x2c] sm:$0xf] %vm546, %v716
    %754 = vst.msk [vmem:[%s741 + $0x30] sm:$0xf] %vm546, %v718
    %755 = vst.msk [vmem:[%s741 + $0x34] sm:$0xf] %vm546, %v720
    %756 = vst.msk [vmem:[%s741 + $0x38] sm:$0xf] %vm546, %v722
    %757 = vst.msk [vmem:[%s741 + $0x3c] sm:$0xf] %vm546, %v724
    %v766 = vunpack.c.l.b16 %v467
    %v767 = vunpack.c.h.b16 %v467
    %v768 = vunpack.c.l.b16 %v470
    %v769 = vunpack.c.h.b16 %v470
    %v770 = vunpack.c.l.b16 %v473
    %v771 = vunpack.c.h.b16 %v473
    %v772 = vunpack.c.l.b16 %v476
    %v773 = vunpack.c.h.b16 %v476
    %v774 = vunpack.c.l.b16 %v479
    %v775 = vunpack.c.h.b16 %v479
    %v776 = vunpack.c.l.b16 %v482
    %v777 = vunpack.c.h.b16 %v482
    %v778 = vunpack.c.l.b16 %v485
    %v779 = vunpack.c.h.b16 %v485
    %v780 = vunpack.c.l.b16 %v488
    %v781 = vunpack.c.h.b16 %v488
    %v782 = vpack.c.b16 %v766, %v766
    %v783 = vpack.c.b16 %v767, %v767
    %v784 = vpack.c.b16 %v768, %v768
    %v785 = vpack.c.b16 %v769, %v769
    %v786 = vpack.c.b16 %v770, %v770
    %v787 = vpack.c.b16 %v771, %v771
    %v788 = vpack.c.b16 %v772, %v772
    %v789 = vpack.c.b16 %v773, %v773
    %v790 = vpack.c.b16 %v774, %v774
    %v791 = vpack.c.b16 %v775, %v775
    %v792 = vpack.c.b16 %v776, %v776
    %v793 = vpack.c.b16 %v777, %v777
    %v794 = vpack.c.b16 %v778, %v778
    %v795 = vpack.c.b16 %v779, %v779
    %v796 = vpack.c.b16 %v780, %v780
    %v797 = vpack.c.b16 %v781, %v781
    %s814 = scalar_lea.vmem [#allocation8], 256
    %815 = vst.msk [vmem:[%s814] sm:$0xf] %vm546, %v782
    %816 = vst.msk [vmem:[%s814 + $0x4] sm:$0xf] %vm546, %v783
    %817 = vst.msk [vmem:[%s814 + $0x8] sm:$0xf] %vm546, %v784
    %818 = vst.msk [vmem:[%s814 + $0xc] sm:$0xf] %vm546, %v785
    %819 = vst.msk [vmem:[%s814 + $0x10] sm:$0xf] %vm546, %v786
    %820 = vst.msk [vmem:[%s814 + $0x14] sm:$0xf] %vm546, %v787
    %821 = vst.msk [vmem:[%s814 + $0x18] sm:$0xf] %vm546, %v788
    %822 = vst.msk [vmem:[%s814 + $0x1c] sm:$0xf] %vm546, %v789
    %823 = vst.msk [vmem:[%s814 + $0x20] sm:$0xf] %vm546, %v790
    %824 = vst.msk [vmem:[%s814 + $0x24] sm:$0xf] %vm546, %v791
    %825 = vst.msk [vmem:[%s814 + $0x28] sm:$0xf] %vm546, %v792
    %826 = vst.msk [vmem:[%s814 + $0x2c] sm:$0xf] %vm546, %v793
    %827 = vst.msk [vmem:[%s814 + $0x30] sm:$0xf] %vm546, %v794
    %828 = vst.msk [vmem:[%s814 + $0x34] sm:$0xf] %vm546, %v795
    %829 = vst.msk [vmem:[%s814 + $0x38] sm:$0xf] %vm546, %v796
    %830 = vst.msk [vmem:[%s814 + $0x3c] sm:$0xf] %vm546, %v797
    %831 = vrot.lane.b32.xlu0 %v782, 96
    %v832 = vpop.permute.xlu0 %831
    %833 = vrot.lane.b32.xlu0 %v783, 96
    %v834 = vpop.permute.xlu0 %833
    %835 = vrot.lane.b32.xlu0 %v784, 96
    %v836 = vpop.permute.xlu0 %835
    %837 = vrot.lane.b32.xlu0 %v785, 96
    %v838 = vpop.permute.xlu0 %837
    %839 = vrot.lane.b32.xlu0 %v786, 96
    %v840 = vpop.permute.xlu0 %839
    %841 = vrot.lane.b32.xlu0 %v787, 96
    %v842 = vpop.permute.xlu0 %841
    %843 = vrot.lane.b32.xlu0 %v788, 96
    %v844 = vpop.permute.xlu0 %843
    %845 = vrot.lane.b32.xlu0 %v789, 96
    %v846 = vpop.permute.xlu0 %845
    %847 = vrot.lane.b32.xlu0 %v790, 96
    %v848 = vpop.permute.xlu0 %847
    %849 = vrot.lane.b32.xlu0 %v791, 96
    %v850 = vpop.permute.xlu0 %849
    %851 = vrot.lane.b32.xlu0 %v792, 96
    %v852 = vpop.permute.xlu0 %851
    %853 = vrot.lane.b32.xlu0 %v793, 96
    %v854 = vpop.permute.xlu0 %853
    %855 = vrot.lane.b32.xlu0 %v794, 96
    %v856 = vpop.permute.xlu0 %855
    %857 = vrot.lane.b32.xlu0 %v795, 96
    %v858 = vpop.permute.xlu0 %857
    %859 = vrot.lane.b32.xlu0 %v796, 96
    %v860 = vpop.permute.xlu0 %859
    %861 = vrot.lane.b32.xlu0 %v797, 96
    %v862 = vpop.permute.xlu0 %861
    %s879 = scalar_lea.vmem [#allocation8], 320
    %880 = vst.msk [vmem:[%s879] sm:$0xf] %vm546, %v832
    %881 = vst.msk [vmem:[%s879 + $0x4] sm:$0xf] %vm546, %v834
    %882 = vst.msk [vmem:[%s879 + $0x8] sm:$0xf] %vm546, %v836
    %883 = vst.msk [vmem:[%s879 + $0xc] sm:$0xf] %vm546, %v838
    %884 = vst.msk [vmem:[%s879 + $0x10] sm:$0xf] %vm546, %v840
    %885 = vst.msk [vmem:[%s879 + $0x14] sm:$0xf] %vm546, %v842
    %886 = vst.msk [vmem:[%s879 + $0x18] sm:$0xf] %vm546, %v844
    %887 = vst.msk [vmem:[%s879 + $0x1c] sm:$0xf] %vm546, %v846
    %888 = vst.msk [vmem:[%s879 + $0x20] sm:$0xf] %vm546, %v848
    %889 = vst.msk [vmem:[%s879 + $0x24] sm:$0xf] %vm546, %v850
    %890 = vst.msk [vmem:[%s879 + $0x28] sm:$0xf] %vm546, %v852
    %891 = vst.msk [vmem:[%s879 + $0x2c] sm:$0xf] %vm546, %v854
    %892 = vst.msk [vmem:[%s879 + $0x30] sm:$0xf] %vm546, %v856
    %893 = vst.msk [vmem:[%s879 + $0x34] sm:$0xf] %vm546, %v858
    %894 = vst.msk [vmem:[%s879 + $0x38] sm:$0xf] %vm546, %v860
    %895 = vst.msk [vmem:[%s879 + $0x3c] sm:$0xf] %vm546, %v862
    %896 = vrot.lane.b32.xlu0 %v782, 64
    %v897 = vpop.permute.xlu0 %896
    %898 = vrot.lane.b32.xlu0 %v783, 64
    %v899 = vpop.permute.xlu0 %898
    %900 = vrot.lane.b32.xlu0 %v784, 64
    %v901 = vpop.permute.xlu0 %900
    %902 = vrot.lane.b32.xlu0 %v785, 64
    %v903 = vpop.permute.xlu0 %902
    %904 = vrot.lane.b32.xlu0 %v786, 64
    %v905 = vpop.permute.xlu0 %904
    %906 = vrot.lane.b32.xlu0 %v787, 64
    %v907 = vpop.permute.xlu0 %906
    %908 = vrot.lane.b32.xlu0 %v788, 64
    %v909 = vpop.permute.xlu0 %908
    %910 = vrot.lane.b32.xlu0 %v789, 64
    %v911 = vpop.permute.xlu0 %910
    %912 = vrot.lane.b32.xlu0 %v790, 64
    %v913 = vpop.permute.xlu0 %912
    %914 = vrot.lane.b32.xlu0 %v791, 64
    %v915 = vpop.permute.xlu0 %914
    %916 = vrot.lane.b32.xlu0 %v792, 64
    %v917 = vpop.permute.xlu0 %916
    %918 = vrot.lane.b32.xlu0 %v793, 64
    %v919 = vpop.permute.xlu0 %918
    %920 = vrot.lane.b32.xlu0 %v794, 64
    %v921 = vpop.permute.xlu0 %920
    %922 = vrot.lane.b32.xlu0 %v795, 64
    %v923 = vpop.permute.xlu0 %922
    %924 = vrot.lane.b32.xlu0 %v796, 64
    %v925 = vpop.permute.xlu0 %924
    %926 = vrot.lane.b32.xlu0 %v797, 64
    %v927 = vpop.permute.xlu0 %926
    %s944 = scalar_lea.vmem [#allocation8], 384
    %945 = vst.msk [vmem:[%s944] sm:$0xf] %vm546, %v897
    %946 = vst.msk [vmem:[%s944 + $0x4] sm:$0xf] %vm546, %v899
    %947 = vst.msk [vmem:[%s944 + $0x8] sm:$0xf] %vm546, %v901
    %948 = vst.msk [vmem:[%s944 + $0xc] sm:$0xf] %vm546, %v903
    %949 = vst.msk [vmem:[%s944 + $0x10] sm:$0xf] %vm546, %v905
    %950 = vst.msk [vmem:[%s944 + $0x14] sm:$0xf] %vm546, %v907
    %951 = vst.msk [vmem:[%s944 + $0x18] sm:$0xf] %vm546, %v909
    %952 = vst.msk [vmem:[%s944 + $0x1c] sm:$0xf] %vm546, %v911
    %953 = vst.msk [vmem:[%s944 + $0x20] sm:$0xf] %vm546, %v913
    %954 = vst.msk [vmem:[%s944 + $0x24] sm:$0xf] %vm546, %v915
    %955 = vst.msk [vmem:[%s944 + $0x28] sm:$0xf] %vm546, %v917
    %956 = vst.msk [vmem:[%s944 + $0x2c] sm:$0xf] %vm546, %v919
    %957 = vst.msk [vmem:[%s944 + $0x30] sm:$0xf] %vm546, %v921
    %958 = vst.msk [vmem:[%s944 + $0x34] sm:$0xf] %vm546, %v923
    %959 = vst.msk [vmem:[%s944 + $0x38] sm:$0xf] %vm546, %v925
    %960 = vst.msk [vmem:[%s944 + $0x3c] sm:$0xf] %vm546, %v927
    %961 = vrot.lane.b32.xlu0 %v782, 32
    %v962 = vpop.permute.xlu0 %961
    %963 = vrot.lane.b32.xlu0 %v783, 32
    %v964 = vpop.permute.xlu0 %963
    %965 = vrot.lane.b32.xlu0 %v784, 32
    %v966 = vpop.permute.xlu0 %965
    %967 = vrot.lane.b32.xlu0 %v785, 32
    %v968 = vpop.permute.xlu0 %967
    %969 = vrot.lane.b32.xlu0 %v786, 32
    %v970 = vpop.permute.xlu0 %969
    %971 = vrot.lane.b32.xlu0 %v787, 32
    %v972 = vpop.permute.xlu0 %971
    %973 = vrot.lane.b32.xlu0 %v788, 32
    %v974 = vpop.permute.xlu0 %973
    %975 = vrot.lane.b32.xlu0 %v789, 32
    %v976 = vpop.permute.xlu0 %975
    %977 = vrot.lane.b32.xlu0 %v790, 32
    %v978 = vpop.permute.xlu0 %977
    %979 = vrot.lane.b32.xlu0 %v791, 32
    %v980 = vpop.permute.xlu0 %979
    %981 = vrot.lane.b32.xlu0 %v792, 32
    %v982 = vpop.permute.xlu0 %981
    %983 = vrot.lane.b32.xlu0 %v793, 32
    %v984 = vpop.permute.xlu0 %983
    %985 = vrot.lane.b32.xlu0 %v794, 32
    %v986 = vpop.permute.xlu0 %985
    %987 = vrot.lane.b32.xlu0 %v795, 32
    %v988 = vpop.permute.xlu0 %987
    %989 = vrot.lane.b32.xlu0 %v796, 32
    %v990 = vpop.permute.xlu0 %989
    %991 = vrot.lane.b32.xlu0 %v797, 32
    %v992 = vpop.permute.xlu0 %991
    %s1009 = scalar_lea.vmem [#allocation8], 448
    %1010 = vst.msk [vmem:[%s1009] sm:$0xf] %vm546, %v962
    %1011 = vst.msk [vmem:[%s1009 + $0x4] sm:$0xf] %vm546, %v964
    %1012 = vst.msk [vmem:[%s1009 + $0x8] sm:$0xf] %vm546, %v966
    %1013 = vst.msk [vmem:[%s1009 + $0xc] sm:$0xf] %vm546, %v968
    %1014 = vst.msk [vmem:[%s1009 + $0x10] sm:$0xf] %vm546, %v970
    %1015 = vst.msk [vmem:[%s1009 + $0x14] sm:$0xf] %vm546, %v972
    %1016 = vst.msk [vmem:[%s1009 + $0x18] sm:$0xf] %vm546, %v974
    %1017 = vst.msk [vmem:[%s1009 + $0x1c] sm:$0xf] %vm546, %v976
    %1018 = vst.msk [vmem:[%s1009 + $0x20] sm:$0xf] %vm546, %v978
    %1019 = vst.msk [vmem:[%s1009 + $0x24] sm:$0xf] %vm546, %v980
    %1020 = vst.msk [vmem:[%s1009 + $0x28] sm:$0xf] %vm546, %v982
    %1021 = vst.msk [vmem:[%s1009 + $0x2c] sm:$0xf] %vm546, %v984
    %1022 = vst.msk [vmem:[%s1009 + $0x30] sm:$0xf] %vm546, %v986
    %1023 = vst.msk [vmem:[%s1009 + $0x34] sm:$0xf] %vm546, %v988
    %1024 = vst.msk [vmem:[%s1009 + $0x38] sm:$0xf] %vm546, %v990
    %1025 = vst.msk [vmem:[%s1009 + $0x3c] sm:$0xf] %vm546, %v992
    %v1034 = vunpack.c.l.b16 %v468
    %v1035 = vunpack.c.h.b16 %v468
    %v1036 = vunpack.c.l.b16 %v471
    %v1037 = vunpack.c.h.b16 %v471
    %v1038 = vunpack.c.l.b16 %v474
    %v1039 = vunpack.c.h.b16 %v474
    %v1040 = vunpack.c.l.b16 %v477
    %v1041 = vunpack.c.h.b16 %v477
    %v1042 = vunpack.c.l.b16 %v480
    %v1043 = vunpack.c.h.b16 %v480
    %v1044 = vunpack.c.l.b16 %v483
    %v1045 = vunpack.c.h.b16 %v483
    %v1046 = vunpack.c.l.b16 %v486
    %v1047 = vunpack.c.h.b16 %v486
    %v1048 = vunpack.c.l.b16 %v489
    %v1049 = vunpack.c.h.b16 %v489
    %v1050 = vpack.c.b16 %v1034, %v1034
    %v1051 = vpack.c.b16 %v1035, %v1035
    %v1052 = vpack.c.b16 %v1036, %v1036
    %v1053 = vpack.c.b16 %v1037, %v1037
    %v1054 = vpack.c.b16 %v1038, %v1038
    %v1055 = vpack.c.b16 %v1039, %v1039
    %v1056 = vpack.c.b16 %v1040, %v1040
    %v1057 = vpack.c.b16 %v1041, %v1041
    %v1058 = vpack.c.b16 %v1042, %v1042
    %v1059 = vpack.c.b16 %v1043, %v1043
    %v1060 = vpack.c.b16 %v1044, %v1044
    %v1061 = vpack.c.b16 %v1045, %v1045
    %v1062 = vpack.c.b16 %v1046, %v1046
    %v1063 = vpack.c.b16 %v1047, %v1047
    %v1064 = vpack.c.b16 %v1048, %v1048
    %v1065 = vpack.c.b16 %v1049, %v1049
    %s1082 = scalar_lea.vmem [#allocation8], 512
    %1083 = vst.msk [vmem:[%s1082] sm:$0xf] %vm546, %v1050
    %1084 = vst.msk [vmem:[%s1082 + $0x4] sm:$0xf] %vm546, %v1051
    %1085 = vst.msk [vmem:[%s1082 + $0x8] sm:$0xf] %vm546, %v1052
    %1086 = vst.msk [vmem:[%s1082 + $0xc] sm:$0xf] %vm546, %v1053
    %1087 = vst.msk [vmem:[%s1082 + $0x10] sm:$0xf] %vm546, %v1054
    %1088 = vst.msk [vmem:[%s1082 + $0x14] sm:$0xf] %vm546, %v1055
    %1089 = vst.msk [vmem:[%s1082 + $0x18] sm:$0xf] %vm546, %v1056
    %1090 = vst.msk [vmem:[%s1082 + $0x1c] sm:$0xf] %vm546, %v1057
    %1091 = vst.msk [vmem:[%s1082 + $0x20] sm:$0xf] %vm546, %v1058
    %1092 = vst.msk [vmem:[%s1082 + $0x24] sm:$0xf] %vm546, %v1059
    %1093 = vst.msk [vmem:[%s1082 + $0x28] sm:$0xf] %vm546, %v1060
    %1094 = vst.msk [vmem:[%s1082 + $0x2c] sm:$0xf] %vm546, %v1061
    %1095 = vst.msk [vmem:[%s1082 + $0x30] sm:$0xf] %vm546, %v1062
    %1096 = vst.msk [vmem:[%s1082 + $0x34] sm:$0xf] %vm546, %v1063
    %1097 = vst.msk [vmem:[%s1082 + $0x38] sm:$0xf] %vm546, %v1064
    %1098 = vst.msk [vmem:[%s1082 + $0x3c] sm:$0xf] %vm546, %v1065
    %1099 = vrot.lane.b32.xlu0 %v1050, 96
    %v1100 = vpop.permute.xlu0 %1099
    %1101 = vrot.lane.b32.xlu0 %v1051, 96
    %v1102 = vpop.permute.xlu0 %1101
    %1103 = vrot.lane.b32.xlu0 %v1052, 96
    %v1104 = vpop.permute.xlu0 %1103
    %1105 = vrot.lane.b32.xlu0 %v1053, 96
    %v1106 = vpop.permute.xlu0 %1105
    %1107 = vrot.lane.b32.xlu0 %v1054, 96
    %v1108 = vpop.permute.xlu0 %1107
    %1109 = vrot.lane.b32.xlu0 %v1055, 96
    %v1110 = vpop.permute.xlu0 %1109
    %1111 = vrot.lane.b32.xlu0 %v1056, 96
    %v1112 = vpop.permute.xlu0 %1111
    %1113 = vrot.lane.b32.xlu0 %v1057, 96
    %v1114 = vpop.permute.xlu0 %1113
    %1115 = vrot.lane.b32.xlu0 %v1058, 96
    %v1116 = vpop.permute.xlu0 %1115
    %1117 = vrot.lane.b32.xlu0 %v1059, 96
    %v1118 = vpop.permute.xlu0 %1117
    %1119 = vrot.lane.b32.xlu0 %v1060, 96
    %v1120 = vpop.permute.xlu0 %1119
    %1121 = vrot.lane.b32.xlu0 %v1061, 96
    %v1122 = vpop.permute.xlu0 %1121
    %1123 = vrot.lane.b32.xlu0 %v1062, 96
    %v1124 = vpop.permute.xlu0 %1123
    %1125 = vrot.lane.b32.xlu0 %v1063, 96
    %v1126 = vpop.permute.xlu0 %1125
    %1127 = vrot.lane.b32.xlu0 %v1064, 96
    %v1128 = vpop.permute.xlu0 %1127
    %1129 = vrot.lane.b32.xlu0 %v1065, 96
    %v1130 = vpop.permute.xlu0 %1129
    %s1147 = scalar_lea.vmem [#allocation8], 576
    %1148 = vst.msk [vmem:[%s1147] sm:$0xf] %vm546, %v1100
    %1149 = vst.msk [vmem:[%s1147 + $0x4] sm:$0xf] %vm546, %v1102
    %1150 = vst.msk [vmem:[%s1147 + $0x8] sm:$0xf] %vm546, %v1104
    %1151 = vst.msk [vmem:[%s1147 + $0xc] sm:$0xf] %vm546, %v1106
    %1152 = vst.msk [vmem:[%s1147 + $0x10] sm:$0xf] %vm546, %v1108
    %1153 = vst.msk [vmem:[%s1147 + $0x14] sm:$0xf] %vm546, %v1110
    %1154 = vst.msk [vmem:[%s1147 + $0x18] sm:$0xf] %vm546, %v1112
    %1155 = vst.msk [vmem:[%s1147 + $0x1c] sm:$0xf] %vm546, %v1114
    %1156 = vst.msk [vmem:[%s1147 + $0x20] sm:$0xf] %vm546, %v1116
    %1157 = vst.msk [vmem:[%s1147 + $0x24] sm:$0xf] %vm546, %v1118
    %1158 = vst.msk [vmem:[%s1147 + $0x28] sm:$0xf] %vm546, %v1120
    %1159 = vst.msk [vmem:[%s1147 + $0x2c] sm:$0xf] %vm546, %v1122
    %1160 = vst.msk [vmem:[%s1147 + $0x30] sm:$0xf] %vm546, %v1124
    %1161 = vst.msk [vmem:[%s1147 + $0x34] sm:$0xf] %vm546, %v1126
    %1162 = vst.msk [vmem:[%s1147 + $0x38] sm:$0xf] %vm546, %v1128
    %1163 = vst.msk [vmem:[%s1147 + $0x3c] sm:$0xf] %vm546, %v1130
    %1164 = vrot.lane.b32.xlu0 %v1050, 64
    %v1165 = vpop.permute.xlu0 %1164
    %1166 = vrot.lane.b32.xlu0 %v1051, 64
    %v1167 = vpop.permute.xlu0 %1166
    %1168 = vrot.lane.b32.xlu0 %v1052, 64
    %v1169 = vpop.permute.xlu0 %1168
    %1170 = vrot.lane.b32.xlu0 %v1053, 64
    %v1171 = vpop.permute.xlu0 %1170
    %1172 = vrot.lane.b32.xlu0 %v1054, 64
    %v1173 = vpop.permute.xlu0 %1172
    %1174 = vrot.lane.b32.xlu0 %v1055, 64
    %v1175 = vpop.permute.xlu0 %1174
    %1176 = vrot.lane.b32.xlu0 %v1056, 64
    %v1177 = vpop.permute.xlu0 %1176
    %1178 = vrot.lane.b32.xlu0 %v1057, 64
    %v1179 = vpop.permute.xlu0 %1178
    %1180 = vrot.lane.b32.xlu0 %v1058, 64
    %v1181 = vpop.permute.xlu0 %1180
    %1182 = vrot.lane.b32.xlu0 %v1059, 64
    %v1183 = vpop.permute.xlu0 %1182
    %1184 = vrot.lane.b32.xlu0 %v1060, 64
    %v1185 = vpop.permute.xlu0 %1184
    %1186 = vrot.lane.b32.xlu0 %v1061, 64
    %v1187 = vpop.permute.xlu0 %1186
    %1188 = vrot.lane.b32.xlu0 %v1062, 64
    %v1189 = vpop.permute.xlu0 %1188
    %1190 = vrot.lane.b32.xlu0 %v1063, 64
    %v1191 = vpop.permute.xlu0 %1190
    %1192 = vrot.lane.b32.xlu0 %v1064, 64
    %v1193 = vpop.permute.xlu0 %1192
    %1194 = vrot.lane.b32.xlu0 %v1065, 64
    %v1195 = vpop.permute.xlu0 %1194
    %s1212 = scalar_lea.vmem [#allocation8], 640
    %1213 = vst.msk [vmem:[%s1212] sm:$0xf] %vm546, %v1165
    %1214 = vst.msk [vmem:[%s1212 + $0x4] sm:$0xf] %vm546, %v1167
    %1215 = vst.msk [vmem:[%s1212 + $0x8] sm:$0xf] %vm546, %v1169
    %1216 = vst.msk [vmem:[%s1212 + $0xc] sm:$0xf] %vm546, %v1171
    %1217 = vst.msk [vmem:[%s1212 + $0x10] sm:$0xf] %vm546, %v1173
    %1218 = vst.msk [vmem:[%s1212 + $0x14] sm:$0xf] %vm546, %v1175
    %1219 = vst.msk [vmem:[%s1212 + $0x18] sm:$0xf] %vm546, %v1177
    %1220 = vst.msk [vmem:[%s1212 + $0x1c] sm:$0xf] %vm546, %v1179
    %1221 = vst.msk [vmem:[%s1212 + $0x20] sm:$0xf] %vm546, %v1181
    %1222 = vst.msk [vmem:[%s1212 + $0x24] sm:$0xf] %vm546, %v1183
    %1223 = vst.msk [vmem:[%s1212 + $0x28] sm:$0xf] %vm546, %v1185
    %1224 = vst.msk [vmem:[%s1212 + $0x2c] sm:$0xf] %vm546, %v1187
    %1225 = vst.msk [vmem:[%s1212 + $0x30] sm:$0xf] %vm546, %v1189
    %1226 = vst.msk [vmem:[%s1212 + $0x34] sm:$0xf] %vm546, %v1191
    %1227 = vst.msk [vmem:[%s1212 + $0x38] sm:$0xf] %vm546, %v1193
    %1228 = vst.msk [vmem:[%s1212 + $0x3c] sm:$0xf] %vm546, %v1195
    %1229 = vrot.lane.b32.xlu0 %v1050, 32
    %v1230 = vpop.permute.xlu0 %1229
    %1231 = vrot.lane.b32.xlu0 %v1051, 32
    %v1232 = vpop.permute.xlu0 %1231
    %1233 = vrot.lane.b32.xlu0 %v1052, 32
    %v1234 = vpop.permute.xlu0 %1233
    %1235 = vrot.lane.b32.xlu0 %v1053, 32
    %v1236 = vpop.permute.xlu0 %1235
    %1237 = vrot.lane.b32.xlu0 %v1054, 32
    %v1238 = vpop.permute.xlu0 %1237
    %1239 = vrot.lane.b32.xlu0 %v1055, 32
    %v1240 = vpop.permute.xlu0 %1239
    %1241 = vrot.lane.b32.xlu0 %v1056, 32
    %v1242 = vpop.permute.xlu0 %1241
    %1243 = vrot.lane.b32.xlu0 %v1057, 32
    %v1244 = vpop.permute.xlu0 %1243
    %1245 = vrot.lane.b32.xlu0 %v1058, 32
    %v1246 = vpop.permute.xlu0 %1245
    %1247 = vrot.lane.b32.xlu0 %v1059, 32
    %v1248 = vpop.permute.xlu0 %1247
    %1249 = vrot.lane.b32.xlu0 %v1060, 32
    %v1250 = vpop.permute.xlu0 %1249
    %1251 = vrot.lane.b32.xlu0 %v1061, 32
    %v1252 = vpop.permute.xlu0 %1251
    %1253 = vrot.lane.b32.xlu0 %v1062, 32
    %v1254 = vpop.permute.xlu0 %1253
    %1255 = vrot.lane.b32.xlu0 %v1063, 32
    %v1256 = vpop.permute.xlu0 %1255
    %1257 = vrot.lane.b32.xlu0 %v1064, 32
    %v1258 = vpop.permute.xlu0 %1257
    %1259 = vrot.lane.b32.xlu0 %v1065, 32
    %v1260 = vpop.permute.xlu0 %1259
    %s1277 = scalar_lea.vmem [#allocation8], 704
    %1278 = vst.msk [vmem:[%s1277] sm:$0xf] %vm546, %v1230
    %1279 = vst.msk [vmem:[%s1277 + $0x4] sm:$0xf] %vm546, %v1232
    %1280 = vst.msk [vmem:[%s1277 + $0x8] sm:$0xf] %vm546, %v1234
    %1281 = vst.msk [vmem:[%s1277 + $0xc] sm:$0xf] %vm546, %v1236
    %1282 = vst.msk [vmem:[%s1277 + $0x10] sm:$0xf] %vm546, %v1238
    %1283 = vst.msk [vmem:[%s1277 + $0x14] sm:$0xf] %vm546, %v1240
    %1284 = vst.msk [vmem:[%s1277 + $0x18] sm:$0xf] %vm546, %v1242
    %1285 = vst.msk [vmem:[%s1277 + $0x1c] sm:$0xf] %vm546, %v1244
    %1286 = vst.msk [vmem:[%s1277 + $0x20] sm:$0xf] %vm546, %v1246
    %1287 = vst.msk [vmem:[%s1277 + $0x24] sm:$0xf] %vm546, %v1248
    %1288 = vst.msk [vmem:[%s1277 + $0x28] sm:$0xf] %vm546, %v1250
    %1289 = vst.msk [vmem:[%s1277 + $0x2c] sm:$0xf] %vm546, %v1252
    %1290 = vst.msk [vmem:[%s1277 + $0x30] sm:$0xf] %vm546, %v1254
    %1291 = vst.msk [vmem:[%s1277 + $0x34] sm:$0xf] %vm546, %v1256
    %1292 = vst.msk [vmem:[%s1277 + $0x38] sm:$0xf] %vm546, %v1258
    %1293 = vst.msk [vmem:[%s1277 + $0x3c] sm:$0xf] %vm546, %v1260
    // Predicated region
    $region26: #{tpu_custom_call.1} parent=1 // pred_check
      _
    $region27: #{tpu_custom_call.1} parent=1 // pred_check_branch
      %1295 = sbr.rel (0) target = $region29
    $region28: #{tpu_custom_call.1} parent=1 // pred_region
      %s1297 = ssub.s32 12288, 12288
      %1298 = vsyncadd [#allocation4], %s1297
      %s1299 = sshll.u32 [#allocation8], 4
      %s1300 = int_to_ptr.vmem [resolvable:$true] %s1299
      %1305 = dma.vmem_to_hbm [thread:$0]  %s1300, 12288, %s3, [#allocation4], 64, 64, 4
    $region29: #{tpu_custom_call.1} parent=1 // pred_fallthru
      _
    // Predicated region
    $region30: #{tpu_custom_call.1} parent=1 // pred_check
      _
    $region31: #{tpu_custom_call.1} parent=1 // pred_check_branch
      %1307 = sbr.rel (0) target = $region33
    $region32: #{tpu_custom_call.1} parent=1 // pred_region
      %1308 = dma.done [#allocation4], 12288
    $region33: #{tpu_custom_call.1} parent=1 // pred_fallthru
      _
    %1309 = vsyncpa [#allocation3], 1
    %1310 = vsyncpa [#allocation6], 1
    %1311 = vsyncpa [#allocation4], 1

</llo_original>
